<compile_context>
chip_gen: v7x
topology: tpu7x:2x2x1
jax: 0.10.0
libtpu: 0.0.40
codegen_flags: <defaults>
</compile_context>

<pallas_src>
import jax
import jax.numpy as jnp
from jax.experimental import pallas as pl
from jax.experimental.pallas import tpu as pltpu

# Problem sizes (conv1 = nn.Conv2d(1, 6, 3))
N, H, W = 2, 16, 16
CIN, COUT, KH, KW = 1, 6, 3, 3
OH, OW = H - KH + 1, W - KW + 1          # 14, 14   (valid conv)
PH, PW = OH // 2, OW // 2                # 7, 7     (2x2 max pool, stride 2, floor)


def lenet_conv1_kernel(x_ref, w_ref, b_ref, o_ref):
    """conv1 (3x3 valid) -> ReLU -> 2x2/stride-2 max pool, all channels, single store.

    x_ref: (N, H, W)          f32  VMEM   (CIN==1 squeezed; W on the lane axis)
    w_ref: (KH*KW*COUT,)      f32  SMEM   flat index (kh*KW + kw)*COUT + c
    b_ref: (COUT,)            f32  SMEM
    o_ref: (N, PH, COUT*PW)   f32  VMEM   out[n, ph, c*PW + pw]
    """
    x = x_ref[...]                                              # (N, H, W)

    # 9 shifted views of the input, hoisted out of the channel loop (computed once).
    # Static off-by-one slices lower to cheap shift/relayout work on the otherwise-idle XLU;
    # pltpu.roll would be equivalent at this size.
    patches = [x[:, kh:kh + OH, kw:kw + OW]                     # each (N, OH, OW)
               for kh in range(KH) for kw in range(KW)]

    pooled = []
    for c in range(COUT):
        # --- shift-and-add conv on the VPU, scalar weights read from SMEM ---
        acc = patches[0] * w_ref[c]
        for k in range(1, KH * KW):
            acc = acc + patches[k] * w_ref[k * COUT + c]
        y = jnp.maximum(acc + b_ref[c], 0.0)                    # (N, OH, OW), ReLU

        # --- 2x2 / stride-2 max pool, vectorized over whole maps (no per-element stores) ---
        # vertical (sublane axis): row-pair maxes, one concat
        rp = jnp.concatenate(
            [jnp.maximum(y[:, 2 * i:2 * i + 1, :], y[:, 2 * i + 1:2 * i + 2, :])
             for i in range(PH)],
            axis=1)                                             # (N, PH, OW)
        # horizontal (lane axis): column-pair maxes, one concat
        cp = jnp.concatenate(
            [jnp.maximum(rp[:, :, 2 * j:2 * j + 1], rp[:, :, 2 * j + 1:2 * j + 2])
             for j in range(PW)],
            axis=2)                                             # (N, PH, PW)
        pooled.append(cp)

    # Pack all channels along the lane axis and store the whole block ONCE.
    o_ref[...] = jnp.concatenate(pooled, axis=-1)               # (N, PH, COUT*PW)


def lenet_forward(x_nchw, conv1_w_oihw, conv1_b):
    """Wrapper: NCHW in, NCHW out (matches PyTorch conventions)."""
    x3 = x_nchw[:, 0, :, :].astype(jnp.float32)                                    # (N, H, W)
    # (COUT, 1, KH, KW) -> (KH, KW, COUT) -> flat, index (kh*KW + kw)*COUT + c
    w_flat = jnp.transpose(conv1_w_oihw[:, 0, :, :], (1, 2, 0)).reshape(-1).astype(jnp.float32)
    b = conv1_b.astype(jnp.float32)

    out = pl.pallas_call(
        lenet_conv1_kernel,
        out_shape=jax.ShapeDtypeStruct((N, PH, COUT * PW), jnp.float32),
        in_specs=[
            pl.BlockSpec(memory_space=pltpu.MemorySpace.VMEM),   # x: whole array in VMEM
            pl.BlockSpec(memory_space=pltpu.MemorySpace.SMEM),   # weights: scalars in SMEM
            pl.BlockSpec(memory_space=pltpu.MemorySpace.SMEM),   # bias: scalars in SMEM
        ],
        out_specs=pl.BlockSpec(memory_space=pltpu.MemorySpace.VMEM),
    )(x3, w_flat, b)

    # lane-packed (N, PH, COUT*PW) -> NCHW (N, COUT, PH, PW): pure layout plumbing.
    return out.reshape(N, PH, COUT, PW).transpose(0, 2, 1, 3)


if __name__ == "__main__":
    key = jax.random.PRNGKey(0)
    kx, kw1, kb1, kw2, kb2, kf1, kf2, kf3 = jax.random.split(key, 8)

    # Input (batch=2, 1 channel, 16x16 spatial)
    x = jax.random.normal(kx, (N, CIN, H, W), dtype=jnp.float32)

    # conv1 parameters (deterministic, PyTorch-style uniform bound)
    fan_in = CIN * KH * KW
    bound = 1.0 / (fan_in ** 0.5)
    conv1_w = jax.random.uniform(kw1, (COUT, CIN, KH, KW), jnp.float32, -bound, bound)
    conv1_b = jax.random.uniform(kb1, (COUT,), jnp.float32, -bound, bound)

    # Unused-by-forward parameters, initialized only for shape fidelity with __init__.
    _conv2_w = jax.random.normal(kw2, (16, 6, 3, 3), jnp.float32) * 0.01
    _fc1_w = jax.random.normal(kf1, (120, 16 * 6 * 6), jnp.float32) * 0.01
    _fc2_w = jax.random.normal(kf2, (84, 120), jnp.float32) * 0.01
    _fc3_w = jax.random.normal(kf3, (10, 84), jnp.float32) * 0.01

    out = jax.block_until_ready(lenet_forward(x, conv1_w, conv1_b))

    # Plain-JAX reference for the same computation (conv -> relu -> maxpool 2x2).
    conv = jax.lax.conv_general_dilated(
        x, conv1_w, window_strides=(1, 1), padding="VALID",
        dimension_numbers=("NCHW", "OIHW", "NCHW"))
    ref = jax.lax.reduce_window(
        jnp.maximum(conv + conv1_b[None, :, None, None], 0.0),
        -jnp.inf, jax.lax.max,
        window_dimensions=(1, 1, 2, 2), window_strides=(1, 1, 2, 2),
        padding="VALID")

    assert out.shape == (N, COUT, PH, PW), out.shape
    assert jnp.allclose(out, ref, atol=1e-5, rtol=1e-5), float(jnp.max(jnp.abs(out - ref)))
    print("KERNEL_OK")
</pallas_src>

<mosaic_0001>
module attributes {stable_mosaic.version = 11 : i64} {
  func.func @lenet_conv1_kernel(%arg0: memref<2x16x16xf32, #tpu.memory_space<vmem>>, %arg1: memref<54xf32, #tpu.memory_space<smem>>, %arg2: memref<6xf32, #tpu.memory_space<smem>>, %arg3: memref<2x7x42xf32, #tpu.memory_space<vmem>>) attributes {dimension_semantics = [], scalar_prefetch = 0 : i64, scratch_operands = 0 : i64, tpu.core_type = #tpu.core_type<tc>} {
    %c0 = arith.constant 0 : index
    %c0_0 = arith.constant 0 : index
    %c0_1 = arith.constant 0 : index
    %0 = vector.load %arg0[%c0, %c0_0, %c0_1] : memref<2x16x16xf32, #tpu.memory_space<vmem>>, vector<2x16x16xf32>
    %1 = vector.extract_strided_slice %0 {offsets = [0, 0, 0], sizes = [2, 14, 14], strides = [1, 1, 1]} : vector<2x16x16xf32> to vector<2x14x14xf32>
    %2 = vector.extract_strided_slice %0 {offsets = [0, 0, 1], sizes = [2, 14, 14], strides = [1, 1, 1]} : vector<2x16x16xf32> to vector<2x14x14xf32>
    %3 = vector.extract_strided_slice %0 {offsets = [0, 0, 2], sizes = [2, 14, 14], strides = [1, 1, 1]} : vector<2x16x16xf32> to vector<2x14x14xf32>
    %4 = vector.extract_strided_slice %0 {offsets = [0, 1, 0], sizes = [2, 14, 14], strides = [1, 1, 1]} : vector<2x16x16xf32> to vector<2x14x14xf32>
    %5 = vector.extract_strided_slice %0 {offsets = [0, 1, 1], sizes = [2, 14, 14], strides = [1, 1, 1]} : vector<2x16x16xf32> to vector<2x14x14xf32>
    %6 = vector.extract_strided_slice %0 {offsets = [0, 1, 2], sizes = [2, 14, 14], strides = [1, 1, 1]} : vector<2x16x16xf32> to vector<2x14x14xf32>
    %7 = vector.extract_strided_slice %0 {offsets = [0, 2, 0], sizes = [2, 14, 14], strides = [1, 1, 1]} : vector<2x16x16xf32> to vector<2x14x14xf32>
    %8 = vector.extract_strided_slice %0 {offsets = [0, 2, 1], sizes = [2, 14, 14], strides = [1, 1, 1]} : vector<2x16x16xf32> to vector<2x14x14xf32>
    %9 = vector.extract_strided_slice %0 {offsets = [0, 2, 2], sizes = [2, 14, 14], strides = [1, 1, 1]} : vector<2x16x16xf32> to vector<2x14x14xf32>
    %c0_2 = arith.constant 0 : index
    %10 = memref.load %arg1[%c0_2] : memref<54xf32, #tpu.memory_space<smem>>
    %11 = vector.broadcast %10 : f32 to vector<2x14x14xf32>
    %12 = arith.mulf %1, %11 : vector<2x14x14xf32>
    %c6 = arith.constant 6 : index
    %13 = memref.load %arg1[%c6] : memref<54xf32, #tpu.memory_space<smem>>
    %14 = vector.broadcast %13 : f32 to vector<2x14x14xf32>
    %15 = arith.mulf %2, %14 : vector<2x14x14xf32>
    %16 = arith.addf %12, %15 : vector<2x14x14xf32>
    %c12 = arith.constant 12 : index
    %17 = memref.load %arg1[%c12] : memref<54xf32, #tpu.memory_space<smem>>
    %18 = vector.broadcast %17 : f32 to vector<2x14x14xf32>
    %19 = arith.mulf %3, %18 : vector<2x14x14xf32>
    %20 = arith.addf %16, %19 : vector<2x14x14xf32>
    %c18 = arith.constant 18 : index
    %21 = memref.load %arg1[%c18] : memref<54xf32, #tpu.memory_space<smem>>
    %22 = vector.broadcast %21 : f32 to vector<2x14x14xf32>
    %23 = arith.mulf %4, %22 : vector<2x14x14xf32>
    %24 = arith.addf %20, %23 : vector<2x14x14xf32>
    %c24 = arith.constant 24 : index
    %25 = memref.load %arg1[%c24] : memref<54xf32, #tpu.memory_space<smem>>
    %26 = vector.broadcast %25 : f32 to vector<2x14x14xf32>
    %27 = arith.mulf %5, %26 : vector<2x14x14xf32>
    %28 = arith.addf %24, %27 : vector<2x14x14xf32>
    %c30 = arith.constant 30 : index
    %29 = memref.load %arg1[%c30] : memref<54xf32, #tpu.memory_space<smem>>
    %30 = vector.broadcast %29 : f32 to vector<2x14x14xf32>
    %31 = arith.mulf %6, %30 : vector<2x14x14xf32>
    %32 = arith.addf %28, %31 : vector<2x14x14xf32>
    %c36 = arith.constant 36 : index
    %33 = memref.load %arg1[%c36] : memref<54xf32, #tpu.memory_space<smem>>
    %34 = vector.broadcast %33 : f32 to vector<2x14x14xf32>
    %35 = arith.mulf %7, %34 : vector<2x14x14xf32>
    %36 = arith.addf %32, %35 : vector<2x14x14xf32>
    %c42 = arith.constant 42 : index
    %37 = memref.load %arg1[%c42] : memref<54xf32, #tpu.memory_space<smem>>
    %38 = vector.broadcast %37 : f32 to vector<2x14x14xf32>
    %39 = arith.mulf %8, %38 : vector<2x14x14xf32>
    %40 = arith.addf %36, %39 : vector<2x14x14xf32>
    %c48 = arith.constant 48 : index
    %41 = memref.load %arg1[%c48] : memref<54xf32, #tpu.memory_space<smem>>
    %42 = vector.broadcast %41 : f32 to vector<2x14x14xf32>
    %43 = arith.mulf %9, %42 : vector<2x14x14xf32>
    %44 = arith.addf %40, %43 : vector<2x14x14xf32>
    %c0_3 = arith.constant 0 : index
    %45 = memref.load %arg2[%c0_3] : memref<6xf32, #tpu.memory_space<smem>>
    %46 = vector.broadcast %45 : f32 to vector<2x14x14xf32>
    %47 = arith.addf %44, %46 : vector<2x14x14xf32>
    %cst = arith.constant 0.000000e+00 : f32
    %48 = vector.broadcast %cst : f32 to vector<2x14x14xf32>
    %49 = arith.maximumf %47, %48 : vector<2x14x14xf32>
    %50 = vector.extract_strided_slice %49 {offsets = [0, 0, 0], sizes = [2, 1, 14], strides = [1, 1, 1]} : vector<2x14x14xf32> to vector<2x1x14xf32>
    %51 = vector.extract_strided_slice %49 {offsets = [0, 1, 0], sizes = [2, 1, 14], strides = [1, 1, 1]} : vector<2x14x14xf32> to vector<2x1x14xf32>
    %52 = arith.maximumf %50, %51 : vector<2x1x14xf32>
    %53 = vector.extract_strided_slice %49 {offsets = [0, 2, 0], sizes = [2, 1, 14], strides = [1, 1, 1]} : vector<2x14x14xf32> to vector<2x1x14xf32>
    %54 = vector.extract_strided_slice %49 {offsets = [0, 3, 0], sizes = [2, 1, 14], strides = [1, 1, 1]} : vector<2x14x14xf32> to vector<2x1x14xf32>
    %55 = arith.maximumf %53, %54 : vector<2x1x14xf32>
    %56 = vector.extract_strided_slice %49 {offsets = [0, 4, 0], sizes = [2, 1, 14], strides = [1, 1, 1]} : vector<2x14x14xf32> to vector<2x1x14xf32>
    %57 = vector.extract_strided_slice %49 {offsets = [0, 5, 0], sizes = [2, 1, 14], strides = [1, 1, 1]} : vector<2x14x14xf32> to vector<2x1x14xf32>
    %58 = arith.maximumf %56, %57 : vector<2x1x14xf32>
    %59 = vector.extract_strided_slice %49 {offsets = [0, 6, 0], sizes = [2, 1, 14], strides = [1, 1, 1]} : vector<2x14x14xf32> to vector<2x1x14xf32>
    %60 = vector.extract_strided_slice %49 {offsets = [0, 7, 0], sizes = [2, 1, 14], strides = [1, 1, 1]} : vector<2x14x14xf32> to vector<2x1x14xf32>
    %61 = arith.maximumf %59, %60 : vector<2x1x14xf32>
    %62 = vector.extract_strided_slice %49 {offsets = [0, 8, 0], sizes = [2, 1, 14], strides = [1, 1, 1]} : vector<2x14x14xf32> to vector<2x1x14xf32>
    %63 = vector.extract_strided_slice %49 {offsets = [0, 9, 0], sizes = [2, 1, 14], strides = [1, 1, 1]} : vector<2x14x14xf32> to vector<2x1x14xf32>
    %64 = arith.maximumf %62, %63 : vector<2x1x14xf32>
    %65 = vector.extract_strided_slice %49 {offsets = [0, 10, 0], sizes = [2, 1, 14], strides = [1, 1, 1]} : vector<2x14x14xf32> to vector<2x1x14xf32>
    %66 = vector.extract_strided_slice %49 {offsets = [0, 11, 0], sizes = [2, 1, 14], strides = [1, 1, 1]} : vector<2x14x14xf32> to vector<2x1x14xf32>
    %67 = arith.maximumf %65, %66 : vector<2x1x14xf32>
    %68 = vector.extract_strided_slice %49 {offsets = [0, 12, 0], sizes = [2, 1, 14], strides = [1, 1, 1]} : vector<2x14x14xf32> to vector<2x1x14xf32>
    %69 = vector.extract_strided_slice %49 {offsets = [0, 13, 0], sizes = [2, 1, 14], strides = [1, 1, 1]} : vector<2x14x14xf32> to vector<2x1x14xf32>
    %70 = arith.maximumf %68, %69 : vector<2x1x14xf32>
    %71 = tpu.concatenate %52, %55, %58, %61, %64, %67, %70 in 1 : vector<2x1x14xf32>, vector<2x1x14xf32>, vector<2x1x14xf32>, vector<2x1x14xf32>, vector<2x1x14xf32>, vector<2x1x14xf32>, vector<2x1x14xf32> -> vector<2x7x14xf32>
    %72 = vector.extract_strided_slice %71 {offsets = [0, 0, 0], sizes = [2, 7, 1], strides = [1, 1, 1]} : vector<2x7x14xf32> to vector<2x7x1xf32>
    %73 = vector.extract_strided_slice %71 {offsets = [0, 0, 1], sizes = [2, 7, 1], strides = [1, 1, 1]} : vector<2x7x14xf32> to vector<2x7x1xf32>
    %74 = arith.maximumf %72, %73 : vector<2x7x1xf32>
    %75 = vector.extract_strided_slice %71 {offsets = [0, 0, 2], sizes = [2, 7, 1], strides = [1, 1, 1]} : vector<2x7x14xf32> to vector<2x7x1xf32>
    %76 = vector.extract_strided_slice %71 {offsets = [0, 0, 3], sizes = [2, 7, 1], strides = [1, 1, 1]} : vector<2x7x14xf32> to vector<2x7x1xf32>
    %77 = arith.maximumf %75, %76 : vector<2x7x1xf32>
    %78 = vector.extract_strided_slice %71 {offsets = [0, 0, 4], sizes = [2, 7, 1], strides = [1, 1, 1]} : vector<2x7x14xf32> to vector<2x7x1xf32>
    %79 = vector.extract_strided_slice %71 {offsets = [0, 0, 5], sizes = [2, 7, 1], strides = [1, 1, 1]} : vector<2x7x14xf32> to vector<2x7x1xf32>
    %80 = arith.maximumf %78, %79 : vector<2x7x1xf32>
    %81 = vector.extract_strided_slice %71 {offsets = [0, 0, 6], sizes = [2, 7, 1], strides = [1, 1, 1]} : vector<2x7x14xf32> to vector<2x7x1xf32>
    %82 = vector.extract_strided_slice %71 {offsets = [0, 0, 7], sizes = [2, 7, 1], strides = [1, 1, 1]} : vector<2x7x14xf32> to vector<2x7x1xf32>
    %83 = arith.maximumf %81, %82 : vector<2x7x1xf32>
    %84 = vector.extract_strided_slice %71 {offsets = [0, 0, 8], sizes = [2, 7, 1], strides = [1, 1, 1]} : vector<2x7x14xf32> to vector<2x7x1xf32>
    %85 = vector.extract_strided_slice %71 {offsets = [0, 0, 9], sizes = [2, 7, 1], strides = [1, 1, 1]} : vector<2x7x14xf32> to vector<2x7x1xf32>
    %86 = arith.maximumf %84, %85 : vector<2x7x1xf32>
    %87 = vector.extract_strided_slice %71 {offsets = [0, 0, 10], sizes = [2, 7, 1], strides = [1, 1, 1]} : vector<2x7x14xf32> to vector<2x7x1xf32>
    %88 = vector.extract_strided_slice %71 {offsets = [0, 0, 11], sizes = [2, 7, 1], strides = [1, 1, 1]} : vector<2x7x14xf32> to vector<2x7x1xf32>
    %89 = arith.maximumf %87, %88 : vector<2x7x1xf32>
    %90 = vector.extract_strided_slice %71 {offsets = [0, 0, 12], sizes = [2, 7, 1], strides = [1, 1, 1]} : vector<2x7x14xf32> to vector<2x7x1xf32>
    %91 = vector.extract_strided_slice %71 {offsets = [0, 0, 13], sizes = [2, 7, 1], strides = [1, 1, 1]} : vector<2x7x14xf32> to vector<2x7x1xf32>
    %92 = arith.maximumf %90, %91 : vector<2x7x1xf32>
    %93 = tpu.concatenate %74, %77, %80, %83, %86, %89, %92 in 2 : vector<2x7x1xf32>, vector<2x7x1xf32>, vector<2x7x1xf32>, vector<2x7x1xf32>, vector<2x7x1xf32>, vector<2x7x1xf32>, vector<2x7x1xf32> -> vector<2x7x7xf32>
    %c1 = arith.constant 1 : index
    %94 = memref.load %arg1[%c1] : memref<54xf32, #tpu.memory_space<smem>>
    %95 = vector.broadcast %94 : f32 to vector<2x14x14xf32>
    %96 = arith.mulf %1, %95 : vector<2x14x14xf32>
    %c7 = arith.constant 7 : index
    %97 = memref.load %arg1[%c7] : memref<54xf32, #tpu.memory_space<smem>>
    %98 = vector.broadcast %97 : f32 to vector<2x14x14xf32>
    %99 = arith.mulf %2, %98 : vector<2x14x14xf32>
    %100 = arith.addf %96, %99 : vector<2x14x14xf32>
    %c13 = arith.constant 13 : index
    %101 = memref.load %arg1[%c13] : memref<54xf32, #tpu.memory_space<smem>>
    %102 = vector.broadcast %101 : f32 to vector<2x14x14xf32>
    %103 = arith.mulf %3, %102 : vector<2x14x14xf32>
    %104 = arith.addf %100, %103 : vector<2x14x14xf32>
    %c19 = arith.constant 19 : index
    %105 = memref.load %arg1[%c19] : memref<54xf32, #tpu.memory_space<smem>>
    %106 = vector.broadcast %105 : f32 to vector<2x14x14xf32>
    %107 = arith.mulf %4, %106 : vector<2x14x14xf32>
    %108 = arith.addf %104, %107 : vector<2x14x14xf32>
    %c25 = arith.constant 25 : index
    %109 = memref.load %arg1[%c25] : memref<54xf32, #tpu.memory_space<smem>>
    %110 = vector.broadcast %109 : f32 to vector<2x14x14xf32>
    %111 = arith.mulf %5, %110 : vector<2x14x14xf32>
    %112 = arith.addf %108, %111 : vector<2x14x14xf32>
    %c31 = arith.constant 31 : index
    %113 = memref.load %arg1[%c31] : memref<54xf32, #tpu.memory_space<smem>>
    %114 = vector.broadcast %113 : f32 to vector<2x14x14xf32>
    %115 = arith.mulf %6, %114 : vector<2x14x14xf32>
    %116 = arith.addf %112, %115 : vector<2x14x14xf32>
    %c37 = arith.constant 37 : index
    %117 = memref.load %arg1[%c37] : memref<54xf32, #tpu.memory_space<smem>>
    %118 = vector.broadcast %117 : f32 to vector<2x14x14xf32>
    %119 = arith.mulf %7, %118 : vector<2x14x14xf32>
    %120 = arith.addf %116, %119 : vector<2x14x14xf32>
    %c43 = arith.constant 43 : index
    %121 = memref.load %arg1[%c43] : memref<54xf32, #tpu.memory_space<smem>>
    %122 = vector.broadcast %121 : f32 to vector<2x14x14xf32>
    %123 = arith.mulf %8, %122 : vector<2x14x14xf32>
    %124 = arith.addf %120, %123 : vector<2x14x14xf32>
    %c49 = arith.constant 49 : index
    %125 = memref.load %arg1[%c49] : memref<54xf32, #tpu.memory_space<smem>>
    %126 = vector.broadcast %125 : f32 to vector<2x14x14xf32>
    %127 = arith.mulf %9, %126 : vector<2x14x14xf32>
    %128 = arith.addf %124, %127 : vector<2x14x14xf32>
    %c1_4 = arith.constant 1 : index
    %129 = memref.load %arg2[%c1_4] : memref<6xf32, #tpu.memory_space<smem>>
    %130 = vector.broadcast %129 : f32 to vector<2x14x14xf32>
    %131 = arith.addf %128, %130 : vector<2x14x14xf32>
    %cst_5 = arith.constant 0.000000e+00 : f32
    %132 = vector.broadcast %cst_5 : f32 to vector<2x14x14xf32>
    %133 = arith.maximumf %131, %132 : vector<2x14x14xf32>
    %134 = vector.extract_strided_slice %133 {offsets = [0, 0, 0], sizes = [2, 1, 14], strides = [1, 1, 1]} : vector<2x14x14xf32> to vector<2x1x14xf32>
    %135 = vector.extract_strided_slice %133 {offsets = [0, 1, 0], sizes = [2, 1, 14], strides = [1, 1, 1]} : vector<2x14x14xf32> to vector<2x1x14xf32>
    %136 = arith.maximumf %134, %135 : vector<2x1x14xf32>
    %137 = vector.extract_strided_slice %133 {offsets = [0, 2, 0], sizes = [2, 1, 14], strides = [1, 1, 1]} : vector<2x14x14xf32> to vector<2x1x14xf32>
    %138 = vector.extract_strided_slice %133 {offsets = [0, 3, 0], sizes = [2, 1, 14], strides = [1, 1, 1]} : vector<2x14x14xf32> to vector<2x1x14xf32>
    %139 = arith.maximumf %137, %138 : vector<2x1x14xf32>
    %140 = vector.extract_strided_slice %133 {offsets = [0, 4, 0], sizes = [2, 1, 14], strides = [1, 1, 1]} : vector<2x14x14xf32> to vector<2x1x14xf32>
    %141 = vector.extract_strided_slice %133 {offsets = [0, 5, 0], sizes = [2, 1, 14], strides = [1, 1, 1]} : vector<2x14x14xf32> to vector<2x1x14xf32>
    %142 = arith.maximumf %140, %141 : vector<2x1x14xf32>
    %143 = vector.extract_strided_slice %133 {offsets = [0, 6, 0], sizes = [2, 1, 14], strides = [1, 1, 1]} : vector<2x14x14xf32> to vector<2x1x14xf32>
    %144 = vector.extract_strided_slice %133 {offsets = [0, 7, 0], sizes = [2, 1, 14], strides = [1, 1, 1]} : vector<2x14x14xf32> to vector<2x1x14xf32>
    %145 = arith.maximumf %143, %144 : vector<2x1x14xf32>
    %146 = vector.extract_strided_slice %133 {offsets = [0, 8, 0], sizes = [2, 1, 14], strides = [1, 1, 1]} : vector<2x14x14xf32> to vector<2x1x14xf32>
    %147 = vector.extract_strided_slice %133 {offsets = [0, 9, 0], sizes = [2, 1, 14], strides = [1, 1, 1]} : vector<2x14x14xf32> to vector<2x1x14xf32>
    %148 = arith.maximumf %146, %147 : vector<2x1x14xf32>
    %149 = vector.extract_strided_slice %133 {offsets = [0, 10, 0], sizes = [2, 1, 14], strides = [1, 1, 1]} : vector<2x14x14xf32> to vector<2x1x14xf32>
    %150 = vector.extract_strided_slice %133 {offsets = [0, 11, 0], sizes = [2, 1, 14], strides = [1, 1, 1]} : vector<2x14x14xf32> to vector<2x1x14xf32>
    %151 = arith.maximumf %149, %150 : vector<2x1x14xf32>
    %152 = vector.extract_strided_slice %133 {offsets = [0, 12, 0], sizes = [2, 1, 14], strides = [1, 1, 1]} : vector<2x14x14xf32> to vector<2x1x14xf32>
    %153 = vector.extract_strided_slice %133 {offsets = [0, 13, 0], sizes = [2, 1, 14], strides = [1, 1, 1]} : vector<2x14x14xf32> to vector<2x1x14xf32>
    %154 = arith.maximumf %152, %153 : vector<2x1x14xf32>
    %155 = tpu.concatenate %136, %139, %142, %145, %148, %151, %154 in 1 : vector<2x1x14xf32>, vector<2x1x14xf32>, vector<2x1x14xf32>, vector<2x1x14xf32>, vector<2x1x14xf32>, vector<2x1x14xf32>, vector<2x1x14xf32> -> vector<2x7x14xf32>
    %156 = vector.extract_strided_slice %155 {offsets = [0, 0, 0], sizes = [2, 7, 1], strides = [1, 1, 1]} : vector<2x7x14xf32> to vector<2x7x1xf32>
    %157 = vector.extract_strided_slice %155 {offsets = [0, 0, 1], sizes = [2, 7, 1], strides = [1, 1, 1]} : vector<2x7x14xf32> to vector<2x7x1xf32>
    %158 = arith.maximumf %156, %157 : vector<2x7x1xf32>
    %159 = vector.extract_strided_slice %155 {offsets = [0, 0, 2], sizes = [2, 7, 1], strides = [1, 1, 1]} : vector<2x7x14xf32> to vector<2x7x1xf32>
    %160 = vector.extract_strided_slice %155 {offsets = [0, 0, 3], sizes = [2, 7, 1], strides = [1, 1, 1]} : vector<2x7x14xf32> to vector<2x7x1xf32>
    %161 = arith.maximumf %159, %160 : vector<2x7x1xf32>
    %162 = vector.extract_strided_slice %155 {offsets = [0, 0, 4], sizes = [2, 7, 1], strides = [1, 1, 1]} : vector<2x7x14xf32> to vector<2x7x1xf32>
    %163 = vector.extract_strided_slice %155 {offsets = [0, 0, 5], sizes = [2, 7, 1], strides = [1, 1, 1]} : vector<2x7x14xf32> to vector<2x7x1xf32>
    %164 = arith.maximumf %162, %163 : vector<2x7x1xf32>
    %165 = vector.extract_strided_slice %155 {offsets = [0, 0, 6], sizes = [2, 7, 1], strides = [1, 1, 1]} : vector<2x7x14xf32> to vector<2x7x1xf32>
    %166 = vector.extract_strided_slice %155 {offsets = [0, 0, 7], sizes = [2, 7, 1], strides = [1, 1, 1]} : vector<2x7x14xf32> to vector<2x7x1xf32>
    %167 = arith.maximumf %165, %166 : vector<2x7x1xf32>
    %168 = vector.extract_strided_slice %155 {offsets = [0, 0, 8], sizes = [2, 7, 1], strides = [1, 1, 1]} : vector<2x7x14xf32> to vector<2x7x1xf32>
    %169 = vector.extract_strided_slice %155 {offsets = [0, 0, 9], sizes = [2, 7, 1], strides = [1, 1, 1]} : vector<2x7x14xf32> to vector<2x7x1xf32>
    %170 = arith.maximumf %168, %169 : vector<2x7x1xf32>
    %171 = vector.extract_strided_slice %155 {offsets = [0, 0, 10], sizes = [2, 7, 1], strides = [1, 1, 1]} : vector<2x7x14xf32> to vector<2x7x1xf32>
    %172 = vector.extract_strided_slice %155 {offsets = [0, 0, 11], sizes = [2, 7, 1], strides = [1, 1, 1]} : vector<2x7x14xf32> to vector<2x7x1xf32>
    %173 = arith.maximumf %171, %172 : vector<2x7x1xf32>
    %174 = vector.extract_strided_slice %155 {offsets = [0, 0, 12], sizes = [2, 7, 1], strides = [1, 1, 1]} : vector<2x7x14xf32> to vector<2x7x1xf32>
    %175 = vector.extract_strided_slice %155 {offsets = [0, 0, 13], sizes = [2, 7, 1], strides = [1, 1, 1]} : vector<2x7x14xf32> to vector<2x7x1xf32>
    %176 = arith.maximumf %174, %175 : vector<2x7x1xf32>
    %177 = tpu.concatenate %158, %161, %164, %167, %170, %173, %176 in 2 : vector<2x7x1xf32>, vector<2x7x1xf32>, vector<2x7x1xf32>, vector<2x7x1xf32>, vector<2x7x1xf32>, vector<2x7x1xf32>, vector<2x7x1xf32> -> vector<2x7x7xf32>
    %c2 = arith.constant 2 : index
    %178 = memref.load %arg1[%c2] : memref<54xf32, #tpu.memory_space<smem>>
    %179 = vector.broadcast %178 : f32 to vector<2x14x14xf32>
    %180 = arith.mulf %1, %179 : vector<2x14x14xf32>
    %c8 = arith.constant 8 : index
    %181 = memref.load %arg1[%c8] : memref<54xf32, #tpu.memory_space<smem>>
    %182 = vector.broadcast %181 : f32 to vector<2x14x14xf32>
    %183 = arith.mulf %2, %182 : vector<2x14x14xf32>
    %184 = arith.addf %180, %183 : vector<2x14x14xf32>
    %c14 = arith.constant 14 : index
    %185 = memref.load %arg1[%c14] : memref<54xf32, #tpu.memory_space<smem>>
    %186 = vector.broadcast %185 : f32 to vector<2x14x14xf32>
    %187 = arith.mulf %3, %186 : vector<2x14x14xf32>
    %188 = arith.addf %184, %187 : vector<2x14x14xf32>
    %c20 = arith.constant 20 : index
    %189 = memref.load %arg1[%c20] : memref<54xf32, #tpu.memory_space<smem>>
    %190 = vector.broadcast %189 : f32 to vector<2x14x14xf32>
    %191 = arith.mulf %4, %190 : vector<2x14x14xf32>
    %192 = arith.addf %188, %191 : vector<2x14x14xf32>
    %c26 = arith.constant 26 : index
    %193 = memref.load %arg1[%c26] : memref<54xf32, #tpu.memory_space<smem>>
    %194 = vector.broadcast %193 : f32 to vector<2x14x14xf32>
    %195 = arith.mulf %5, %194 : vector<2x14x14xf32>
    %196 = arith.addf %192, %195 : vector<2x14x14xf32>
    %c32 = arith.constant 32 : index
    %197 = memref.load %arg1[%c32] : memref<54xf32, #tpu.memory_space<smem>>
    %198 = vector.broadcast %197 : f32 to vector<2x14x14xf32>
    %199 = arith.mulf %6, %198 : vector<2x14x14xf32>
    %200 = arith.addf %196, %199 : vector<2x14x14xf32>
    %c38 = arith.constant 38 : index
    %201 = memref.load %arg1[%c38] : memref<54xf32, #tpu.memory_space<smem>>
    %202 = vector.broadcast %201 : f32 to vector<2x14x14xf32>
    %203 = arith.mulf %7, %202 : vector<2x14x14xf32>
    %204 = arith.addf %200, %203 : vector<2x14x14xf32>
    %c44 = arith.constant 44 : index
    %205 = memref.load %arg1[%c44] : memref<54xf32, #tpu.memory_space<smem>>
    %206 = vector.broadcast %205 : f32 to vector<2x14x14xf32>
    %207 = arith.mulf %8, %206 : vector<2x14x14xf32>
    %208 = arith.addf %204, %207 : vector<2x14x14xf32>
    %c50 = arith.constant 50 : index
    %209 = memref.load %arg1[%c50] : memref<54xf32, #tpu.memory_space<smem>>
    %210 = vector.broadcast %209 : f32 to vector<2x14x14xf32>
    %211 = arith.mulf %9, %210 : vector<2x14x14xf32>
    %212 = arith.addf %208, %211 : vector<2x14x14xf32>
    %c2_6 = arith.constant 2 : index
    %213 = memref.load %arg2[%c2_6] : memref<6xf32, #tpu.memory_space<smem>>
    %214 = vector.broadcast %213 : f32 to vector<2x14x14xf32>
    %215 = arith.addf %212, %214 : vector<2x14x14xf32>
    %cst_7 = arith.constant 0.000000e+00 : f32
    %216 = vector.broadcast %cst_7 : f32 to vector<2x14x14xf32>
    %217 = arith.maximumf %215, %216 : vector<2x14x14xf32>
    %218 = vector.extract_strided_slice %217 {offsets = [0, 0, 0], sizes = [2, 1, 14], strides = [1, 1, 1]} : vector<2x14x14xf32> to vector<2x1x14xf32>
    %219 = vector.extract_strided_slice %217 {offsets = [0, 1, 0], sizes = [2, 1, 14], strides = [1, 1, 1]} : vector<2x14x14xf32> to vector<2x1x14xf32>
    %220 = arith.maximumf %218, %219 : vector<2x1x14xf32>
    %221 = vector.extract_strided_slice %217 {offsets = [0, 2, 0], sizes = [2, 1, 14], strides = [1, 1, 1]} : vector<2x14x14xf32> to vector<2x1x14xf32>
    %222 = vector.extract_strided_slice %217 {offsets = [0, 3, 0], sizes = [2, 1, 14], strides = [1, 1, 1]} : vector<2x14x14xf32> to vector<2x1x14xf32>
    %223 = arith.maximumf %221, %222 : vector<2x1x14xf32>
    %224 = vector.extract_strided_slice %217 {offsets = [0, 4, 0], sizes = [2, 1, 14], strides = [1, 1, 1]} : vector<2x14x14xf32> to vector<2x1x14xf32>
    %225 = vector.extract_strided_slice %217 {offsets = [0, 5, 0], sizes = [2, 1, 14], strides = [1, 1, 1]} : vector<2x14x14xf32> to vector<2x1x14xf32>
    %226 = arith.maximumf %224, %225 : vector<2x1x14xf32>
    %227 = vector.extract_strided_slice %217 {offsets = [0, 6, 0], sizes = [2, 1, 14], strides = [1, 1, 1]} : vector<2x14x14xf32> to vector<2x1x14xf32>
    %228 = vector.extract_strided_slice %217 {offsets = [0, 7, 0], sizes = [2, 1, 14], strides = [1, 1, 1]} : vector<2x14x14xf32> to vector<2x1x14xf32>
    %229 = arith.maximumf %227, %228 : vector<2x1x14xf32>
    %230 = vector.extract_strided_slice %217 {offsets = [0, 8, 0], sizes = [2, 1, 14], strides = [1, 1, 1]} : vector<2x14x14xf32> to vector<2x1x14xf32>
    %231 = vector.extract_strided_slice %217 {offsets = [0, 9, 0], sizes = [2, 1, 14], strides = [1, 1, 1]} : vector<2x14x14xf32> to vector<2x1x14xf32>
    %232 = arith.maximumf %230, %231 : vector<2x1x14xf32>
    %233 = vector.extract_strided_slice %217 {offsets = [0, 10, 0], sizes = [2, 1, 14], strides = [1, 1, 1]} : vector<2x14x14xf32> to vector<2x1x14xf32>
    %234 = vector.extract_strided_slice %217 {offsets = [0, 11, 0], sizes = [2, 1, 14], strides = [1, 1, 1]} : vector<2x14x14xf32> to vector<2x1x14xf32>
    %235 = arith.maximumf %233, %234 : vector<2x1x14xf32>
    %236 = vector.extract_strided_slice %217 {offsets = [0, 12, 0], sizes = [2, 1, 14], strides = [1, 1, 1]} : vector<2x14x14xf32> to vector<2x1x14xf32>
    %237 = vector.extract_strided_slice %217 {offsets = [0, 13, 0], sizes = [2, 1, 14], strides = [1, 1, 1]} : vector<2x14x14xf32> to vector<2x1x14xf32>
    %238 = arith.maximumf %236, %237 : vector<2x1x14xf32>
    %239 = tpu.concatenate %220, %223, %226, %229, %232, %235, %238 in 1 : vector<2x1x14xf32>, vector<2x1x14xf32>, vector<2x1x14xf32>, vector<2x1x14xf32>, vector<2x1x14xf32>, vector<2x1x14xf32>, vector<2x1x14xf32> -> vector<2x7x14xf32>
    %240 = vector.extract_strided_slice %239 {offsets = [0, 0, 0], sizes = [2, 7, 1], strides = [1, 1, 1]} : vector<2x7x14xf32> to vector<2x7x1xf32>
    %241 = vector.extract_strided_slice %239 {offsets = [0, 0, 1], sizes = [2, 7, 1], strides = [1, 1, 1]} : vector<2x7x14xf32> to vector<2x7x1xf32>
    %242 = arith.maximumf %240, %241 : vector<2x7x1xf32>
    %243 = vector.extract_strided_slice %239 {offsets = [0, 0, 2], sizes = [2, 7, 1], strides = [1, 1, 1]} : vector<2x7x14xf32> to vector<2x7x1xf32>
    %244 = vector.extract_strided_slice %239 {offsets = [0, 0, 3], sizes = [2, 7, 1], strides = [1, 1, 1]} : vector<2x7x14xf32> to vector<2x7x1xf32>
    %245 = arith.maximumf %243, %244 : vector<2x7x1xf32>
    %246 = vector.extract_strided_slice %239 {offsets = [0, 0, 4], sizes = [2, 7, 1], strides = [1, 1, 1]} : vector<2x7x14xf32> to vector<2x7x1xf32>
    %247 = vector.extract_strided_slice %239 {offsets = [0, 0, 5], sizes = [2, 7, 1], strides = [1, 1, 1]} : vector<2x7x14xf32> to vector<2x7x1xf32>
    %248 = arith.maximumf %246, %247 : vector<2x7x1xf32>
    %249 = vector.extract_strided_slice %239 {offsets = [0, 0, 6], sizes = [2, 7, 1], strides = [1, 1, 1]} : vector<2x7x14xf32> to vector<2x7x1xf32>
    %250 = vector.extract_strided_slice %239 {offsets = [0, 0, 7], sizes = [2, 7, 1], strides = [1, 1, 1]} : vector<2x7x14xf32> to vector<2x7x1xf32>
    %251 = arith.maximumf %249, %250 : vector<2x7x1xf32>
    %252 = vector.extract_strided_slice %239 {offsets = [0, 0, 8], sizes = [2, 7, 1], strides = [1, 1, 1]} : vector<2x7x14xf32> to vector<2x7x1xf32>
    %253 = vector.extract_strided_slice %239 {offsets = [0, 0, 9], sizes = [2, 7, 1], strides = [1, 1, 1]} : vector<2x7x14xf32> to vector<2x7x1xf32>
    %254 = arith.maximumf %252, %253 : vector<2x7x1xf32>
    %255 = vector.extract_strided_slice %239 {offsets = [0, 0, 10], sizes = [2, 7, 1], strides = [1, 1, 1]} : vector<2x7x14xf32> to vector<2x7x1xf32>
    %256 = vector.extract_strided_slice %239 {offsets = [0, 0, 11], sizes = [2, 7, 1], strides = [1, 1, 1]} : vector<2x7x14xf32> to vector<2x7x1xf32>
    %257 = arith.maximumf %255, %256 : vector<2x7x1xf32>
    %258 = vector.extract_strided_slice %239 {offsets = [0, 0, 12], sizes = [2, 7, 1], strides = [1, 1, 1]} : vector<2x7x14xf32> to vector<2x7x1xf32>
    %259 = vector.extract_strided_slice %239 {offsets = [0, 0, 13], sizes = [2, 7, 1], strides = [1, 1, 1]} : vector<2x7x14xf32> to vector<2x7x1xf32>
    %260 = arith.maximumf %258, %259 : vector<2x7x1xf32>
    %261 = tpu.concatenate %242, %245, %248, %251, %254, %257, %260 in 2 : vector<2x7x1xf32>, vector<2x7x1xf32>, vector<2x7x1xf32>, vector<2x7x1xf32>, vector<2x7x1xf32>, vector<2x7x1xf32>, vector<2x7x1xf32> -> vector<2x7x7xf32>
    %c3 = arith.constant 3 : index
    %262 = memref.load %arg1[%c3] : memref<54xf32, #tpu.memory_space<smem>>
    %263 = vector.broadcast %262 : f32 to vector<2x14x14xf32>
    %264 = arith.mulf %1, %263 : vector<2x14x14xf32>
    %c9 = arith.constant 9 : index
    %265 = memref.load %arg1[%c9] : memref<54xf32, #tpu.memory_space<smem>>
    %266 = vector.broadcast %265 : f32 to vector<2x14x14xf32>
    %267 = arith.mulf %2, %266 : vector<2x14x14xf32>
    %268 = arith.addf %264, %267 : vector<2x14x14xf32>
    %c15 = arith.constant 15 : index
    %269 = memref.load %arg1[%c15] : memref<54xf32, #tpu.memory_space<smem>>
    %270 = vector.broadcast %269 : f32 to vector<2x14x14xf32>
    %271 = arith.mulf %3, %270 : vector<2x14x14xf32>
    %272 = arith.addf %268, %271 : vector<2x14x14xf32>
    %c21 = arith.constant 21 : index
    %273 = memref.load %arg1[%c21] : memref<54xf32, #tpu.memory_space<smem>>
    %274 = vector.broadcast %273 : f32 to vector<2x14x14xf32>
    %275 = arith.mulf %4, %274 : vector<2x14x14xf32>
    %276 = arith.addf %272, %275 : vector<2x14x14xf32>
    %c27 = arith.constant 27 : index
    %277 = memref.load %arg1[%c27] : memref<54xf32, #tpu.memory_space<smem>>
    %278 = vector.broadcast %277 : f32 to vector<2x14x14xf32>
    %279 = arith.mulf %5, %278 : vector<2x14x14xf32>
    %280 = arith.addf %276, %279 : vector<2x14x14xf32>
    %c33 = arith.constant 33 : index
    %281 = memref.load %arg1[%c33] : memref<54xf32, #tpu.memory_space<smem>>
    %282 = vector.broadcast %281 : f32 to vector<2x14x14xf32>
    %283 = arith.mulf %6, %282 : vector<2x14x14xf32>
    %284 = arith.addf %280, %283 : vector<2x14x14xf32>
    %c39 = arith.constant 39 : index
    %285 = memref.load %arg1[%c39] : memref<54xf32, #tpu.memory_space<smem>>
    %286 = vector.broadcast %285 : f32 to vector<2x14x14xf32>
    %287 = arith.mulf %7, %286 : vector<2x14x14xf32>
    %288 = arith.addf %284, %287 : vector<2x14x14xf32>
    %c45 = arith.constant 45 : index
    %289 = memref.load %arg1[%c45] : memref<54xf32, #tpu.memory_space<smem>>
    %290 = vector.broadcast %289 : f32 to vector<2x14x14xf32>
    %291 = arith.mulf %8, %290 : vector<2x14x14xf32>
    %292 = arith.addf %288, %291 : vector<2x14x14xf32>
    %c51 = arith.constant 51 : index
    %293 = memref.load %arg1[%c51] : memref<54xf32, #tpu.memory_space<smem>>
    %294 = vector.broadcast %293 : f32 to vector<2x14x14xf32>
    %295 = arith.mulf %9, %294 : vector<2x14x14xf32>
    %296 = arith.addf %292, %295 : vector<2x14x14xf32>
    %c3_8 = arith.constant 3 : index
    %297 = memref.load %arg2[%c3_8] : memref<6xf32, #tpu.memory_space<smem>>
    %298 = vector.broadcast %297 : f32 to vector<2x14x14xf32>
    %299 = arith.addf %296, %298 : vector<2x14x14xf32>
    %cst_9 = arith.constant 0.000000e+00 : f32
    %300 = vector.broadcast %cst_9 : f32 to vector<2x14x14xf32>
    %301 = arith.maximumf %299, %300 : vector<2x14x14xf32>
    %302 = vector.extract_strided_slice %301 {offsets = [0, 0, 0], sizes = [2, 1, 14], strides = [1, 1, 1]} : vector<2x14x14xf32> to vector<2x1x14xf32>
    %303 = vector.extract_strided_slice %301 {offsets = [0, 1, 0], sizes = [2, 1, 14], strides = [1, 1, 1]} : vector<2x14x14xf32> to vector<2x1x14xf32>
    %304 = arith.maximumf %302, %303 : vector<2x1x14xf32>
    %305 = vector.extract_strided_slice %301 {offsets = [0, 2, 0], sizes = [2, 1, 14], strides = [1, 1, 1]} : vector<2x14x14xf32> to vector<2x1x14xf32>
    %306 = vector.extract_strided_slice %301 {offsets = [0, 3, 0], sizes = [2, 1, 14], strides = [1, 1, 1]} : vector<2x14x14xf32> to vector<2x1x14xf32>
    %307 = arith.maximumf %305, %306 : vector<2x1x14xf32>
    %308 = vector.extract_strided_slice %301 {offsets = [0, 4, 0], sizes = [2, 1, 14], strides = [1, 1, 1]} : vector<2x14x14xf32> to vector<2x1x14xf32>
    %309 = vector.extract_strided_slice %301 {offsets = [0, 5, 0], sizes = [2, 1, 14], strides = [1, 1, 1]} : vector<2x14x14xf32> to vector<2x1x14xf32>
    %310 = arith.maximumf %308, %309 : vector<2x1x14xf32>
    %311 = vector.extract_strided_slice %301 {offsets = [0, 6, 0], sizes = [2, 1, 14], strides = [1, 1, 1]} : vector<2x14x14xf32> to vector<2x1x14xf32>
    %312 = vector.extract_strided_slice %301 {offsets = [0, 7, 0], sizes = [2, 1, 14], strides = [1, 1, 1]} : vector<2x14x14xf32> to vector<2x1x14xf32>
    %313 = arith.maximumf %311, %312 : vector<2x1x14xf32>
    %314 = vector.extract_strided_slice %301 {offsets = [0, 8, 0], sizes = [2, 1, 14], strides = [1, 1, 1]} : vector<2x14x14xf32> to vector<2x1x14xf32>
    %315 = vector.extract_strided_slice %301 {offsets = [0, 9, 0], sizes = [2, 1, 14], strides = [1, 1, 1]} : vector<2x14x14xf32> to vector<2x1x14xf32>
    %316 = arith.maximumf %314, %315 : vector<2x1x14xf32>
    %317 = vector.extract_strided_slice %301 {offsets = [0, 10, 0], sizes = [2, 1, 14], strides = [1, 1, 1]} : vector<2x14x14xf32> to vector<2x1x14xf32>
    %318 = vector.extract_strided_slice %301 {offsets = [0, 11, 0], sizes = [2, 1, 14], strides = [1, 1, 1]} : vector<2x14x14xf32> to vector<2x1x14xf32>
    %319 = arith.maximumf %317, %318 : vector<2x1x14xf32>
    %320 = vector.extract_strided_slice %301 {offsets = [0, 12, 0], sizes = [2, 1, 14], strides = [1, 1, 1]} : vector<2x14x14xf32> to vector<2x1x14xf32>
    %321 = vector.extract_strided_slice %301 {offsets = [0, 13, 0], sizes = [2, 1, 14], strides = [1, 1, 1]} : vector<2x14x14xf32> to vector<2x1x14xf32>
    %322 = arith.maximumf %320, %321 : vector<2x1x14xf32>
    %323 = tpu.concatenate %304, %307, %310, %313, %316, %319, %322 in 1 : vector<2x1x14xf32>, vector<2x1x14xf32>, vector<2x1x14xf32>, vector<2x1x14xf32>, vector<2x1x14xf32>, vector<2x1x14xf32>, vector<2x1x14xf32> -> vector<2x7x14xf32>
    %324 = vector.extract_strided_slice %323 {offsets = [0, 0, 0], sizes = [2, 7, 1], strides = [1, 1, 1]} : vector<2x7x14xf32> to vector<2x7x1xf32>
    %325 = vector.extract_strided_slice %323 {offsets = [0, 0, 1], sizes = [2, 7, 1], strides = [1, 1, 1]} : vector<2x7x14xf32> to vector<2x7x1xf32>
    %326 = arith.maximumf %324, %325 : vector<2x7x1xf32>
    %327 = vector.extract_strided_slice %323 {offsets = [0, 0, 2], sizes = [2, 7, 1], strides = [1, 1, 1]} : vector<2x7x14xf32> to vector<2x7x1xf32>
    %328 = vector.extract_strided_slice %323 {offsets = [0, 0, 3], sizes = [2, 7, 1], strides = [1, 1, 1]} : vector<2x7x14xf32> to vector<2x7x1xf32>
    %329 = arith.maximumf %327, %328 : vector<2x7x1xf32>
    %330 = vector.extract_strided_slice %323 {offsets = [0, 0, 4], sizes = [2, 7, 1], strides = [1, 1, 1]} : vector<2x7x14xf32> to vector<2x7x1xf32>
    %331 = vector.extract_strided_slice %323 {offsets = [0, 0, 5], sizes = [2, 7, 1], strides = [1, 1, 1]} : vector<2x7x14xf32> to vector<2x7x1xf32>
    %332 = arith.maximumf %330, %331 : vector<2x7x1xf32>
    %333 = vector.extract_strided_slice %323 {offsets = [0, 0, 6], sizes = [2, 7, 1], strides = [1, 1, 1]} : vector<2x7x14xf32> to vector<2x7x1xf32>
    %334 = vector.extract_strided_slice %323 {offsets = [0, 0, 7], sizes = [2, 7, 1], strides = [1, 1, 1]} : vector<2x7x14xf32> to vector<2x7x1xf32>
    %335 = arith.maximumf %333, %334 : vector<2x7x1xf32>
    %336 = vector.extract_strided_slice %323 {offsets = [0, 0, 8], sizes = [2, 7, 1], strides = [1, 1, 1]} : vector<2x7x14xf32> to vector<2x7x1xf32>
    %337 = vector.extract_strided_slice %323 {offsets = [0, 0, 9], sizes = [2, 7, 1], strides = [1, 1, 1]} : vector<2x7x14xf32> to vector<2x7x1xf32>
    %338 = arith.maximumf %336, %337 : vector<2x7x1xf32>
    %339 = vector.extract_strided_slice %323 {offsets = [0, 0, 10], sizes = [2, 7, 1], strides = [1, 1, 1]} : vector<2x7x14xf32> to vector<2x7x1xf32>
    %340 = vector.extract_strided_slice %323 {offsets = [0, 0, 11], sizes = [2, 7, 1], strides = [1, 1, 1]} : vector<2x7x14xf32> to vector<2x7x1xf32>
    %341 = arith.maximumf %339, %340 : vector<2x7x1xf32>
    %342 = vector.extract_strided_slice %323 {offsets = [0, 0, 12], sizes = [2, 7, 1], strides = [1, 1, 1]} : vector<2x7x14xf32> to vector<2x7x1xf32>
    %343 = vector.extract_strided_slice %323 {offsets = [0, 0, 13], sizes = [2, 7, 1], strides = [1, 1, 1]} : vector<2x7x14xf32> to vector<2x7x1xf32>
    %344 = arith.maximumf %342, %343 : vector<2x7x1xf32>
    %345 = tpu.concatenate %326, %329, %332, %335, %338, %341, %344 in 2 : vector<2x7x1xf32>, vector<2x7x1xf32>, vector<2x7x1xf32>, vector<2x7x1xf32>, vector<2x7x1xf32>, vector<2x7x1xf32>, vector<2x7x1xf32> -> vector<2x7x7xf32>
    %c4 = arith.constant 4 : index
    %346 = memref.load %arg1[%c4] : memref<54xf32, #tpu.memory_space<smem>>
    %347 = vector.broadcast %346 : f32 to vector<2x14x14xf32>
    %348 = arith.mulf %1, %347 : vector<2x14x14xf32>
    %c10 = arith.constant 10 : index
    %349 = memref.load %arg1[%c10] : memref<54xf32, #tpu.memory_space<smem>>
    %350 = vector.broadcast %349 : f32 to vector<2x14x14xf32>
    %351 = arith.mulf %2, %350 : vector<2x14x14xf32>
    %352 = arith.addf %348, %351 : vector<2x14x14xf32>
    %c16 = arith.constant 16 : index
    %353 = memref.load %arg1[%c16] : memref<54xf32, #tpu.memory_space<smem>>
    %354 = vector.broadcast %353 : f32 to vector<2x14x14xf32>
    %355 = arith.mulf %3, %354 : vector<2x14x14xf32>
    %356 = arith.addf %352, %355 : vector<2x14x14xf32>
    %c22 = arith.constant 22 : index
    %357 = memref.load %arg1[%c22] : memref<54xf32, #tpu.memory_space<smem>>
    %358 = vector.broadcast %357 : f32 to vector<2x14x14xf32>
    %359 = arith.mulf %4, %358 : vector<2x14x14xf32>
    %360 = arith.addf %356, %359 : vector<2x14x14xf32>
    %c28 = arith.constant 28 : index
    %361 = memref.load %arg1[%c28] : memref<54xf32, #tpu.memory_space<smem>>
    %362 = vector.broadcast %361 : f32 to vector<2x14x14xf32>
    %363 = arith.mulf %5, %362 : vector<2x14x14xf32>
    %364 = arith.addf %360, %363 : vector<2x14x14xf32>
    %c34 = arith.constant 34 : index
    %365 = memref.load %arg1[%c34] : memref<54xf32, #tpu.memory_space<smem>>
    %366 = vector.broadcast %365 : f32 to vector<2x14x14xf32>
    %367 = arith.mulf %6, %366 : vector<2x14x14xf32>
    %368 = arith.addf %364, %367 : vector<2x14x14xf32>
    %c40 = arith.constant 40 : index
    %369 = memref.load %arg1[%c40] : memref<54xf32, #tpu.memory_space<smem>>
    %370 = vector.broadcast %369 : f32 to vector<2x14x14xf32>
    %371 = arith.mulf %7, %370 : vector<2x14x14xf32>
    %372 = arith.addf %368, %371 : vector<2x14x14xf32>
    %c46 = arith.constant 46 : index
    %373 = memref.load %arg1[%c46] : memref<54xf32, #tpu.memory_space<smem>>
    %374 = vector.broadcast %373 : f32 to vector<2x14x14xf32>
    %375 = arith.mulf %8, %374 : vector<2x14x14xf32>
    %376 = arith.addf %372, %375 : vector<2x14x14xf32>
    %c52 = arith.constant 52 : index
    %377 = memref.load %arg1[%c52] : memref<54xf32, #tpu.memory_space<smem>>
    %378 = vector.broadcast %377 : f32 to vector<2x14x14xf32>
    %379 = arith.mulf %9, %378 : vector<2x14x14xf32>
    %380 = arith.addf %376, %379 : vector<2x14x14xf32>
    %c4_10 = arith.constant 4 : index
    %381 = memref.load %arg2[%c4_10] : memref<6xf32, #tpu.memory_space<smem>>
    %382 = vector.broadcast %381 : f32 to vector<2x14x14xf32>
    %383 = arith.addf %380, %382 : vector<2x14x14xf32>
    %cst_11 = arith.constant 0.000000e+00 : f32
    %384 = vector.broadcast %cst_11 : f32 to vector<2x14x14xf32>
    %385 = arith.maximumf %383, %384 : vector<2x14x14xf32>
    %386 = vector.extract_strided_slice %385 {offsets = [0, 0, 0], sizes = [2, 1, 14], strides = [1, 1, 1]} : vector<2x14x14xf32> to vector<2x1x14xf32>
    %387 = vector.extract_strided_slice %385 {offsets = [0, 1, 0], sizes = [2, 1, 14], strides = [1, 1, 1]} : vector<2x14x14xf32> to vector<2x1x14xf32>
    %388 = arith.maximumf %386, %387 : vector<2x1x14xf32>
    %389 = vector.extract_strided_slice %385 {offsets = [0, 2, 0], sizes = [2, 1, 14], strides = [1, 1, 1]} : vector<2x14x14xf32> to vector<2x1x14xf32>
    %390 = vector.extract_strided_slice %385 {offsets = [0, 3, 0], sizes = [2, 1, 14], strides = [1, 1, 1]} : vector<2x14x14xf32> to vector<2x1x14xf32>
    %391 = arith.maximumf %389, %390 : vector<2x1x14xf32>
    %392 = vector.extract_strided_slice %385 {offsets = [0, 4, 0], sizes = [2, 1, 14], strides = [1, 1, 1]} : vector<2x14x14xf32> to vector<2x1x14xf32>
    %393 = vector.extract_strided_slice %385 {offsets = [0, 5, 0], sizes = [2, 1, 14], strides = [1, 1, 1]} : vector<2x14x14xf32> to vector<2x1x14xf32>
    %394 = arith.maximumf %392, %393 : vector<2x1x14xf32>
    %395 = vector.extract_strided_slice %385 {offsets = [0, 6, 0], sizes = [2, 1, 14], strides = [1, 1, 1]} : vector<2x14x14xf32> to vector<2x1x14xf32>
    %396 = vector.extract_strided_slice %385 {offsets = [0, 7, 0], sizes = [2, 1, 14], strides = [1, 1, 1]} : vector<2x14x14xf32> to vector<2x1x14xf32>
    %397 = arith.maximumf %395, %396 : vector<2x1x14xf32>
    %398 = vector.extract_strided_slice %385 {offsets = [0, 8, 0], sizes = [2, 1, 14], strides = [1, 1, 1]} : vector<2x14x14xf32> to vector<2x1x14xf32>
    %399 = vector.extract_strided_slice %385 {offsets = [0, 9, 0], sizes = [2, 1, 14], strides = [1, 1, 1]} : vector<2x14x14xf32> to vector<2x1x14xf32>
    %400 = arith.maximumf %398, %399 : vector<2x1x14xf32>
    %401 = vector.extract_strided_slice %385 {offsets = [0, 10, 0], sizes = [2, 1, 14], strides = [1, 1, 1]} : vector<2x14x14xf32> to vector<2x1x14xf32>
    %402 = vector.extract_strided_slice %385 {offsets = [0, 11, 0], sizes = [2, 1, 14], strides = [1, 1, 1]} : vector<2x14x14xf32> to vector<2x1x14xf32>
    %403 = arith.maximumf %401, %402 : vector<2x1x14xf32>
    %404 = vector.extract_strided_slice %385 {offsets = [0, 12, 0], sizes = [2, 1, 14], strides = [1, 1, 1]} : vector<2x14x14xf32> to vector<2x1x14xf32>
    %405 = vector.extract_strided_slice %385 {offsets = [0, 13, 0], sizes = [2, 1, 14], strides = [1, 1, 1]} : vector<2x14x14xf32> to vector<2x1x14xf32>
    %406 = arith.maximumf %404, %405 : vector<2x1x14xf32>
    %407 = tpu.concatenate %388, %391, %394, %397, %400, %403, %406 in 1 : vector<2x1x14xf32>, vector<2x1x14xf32>, vector<2x1x14xf32>, vector<2x1x14xf32>, vector<2x1x14xf32>, vector<2x1x14xf32>, vector<2x1x14xf32> -> vector<2x7x14xf32>
    %408 = vector.extract_strided_slice %407 {offsets = [0, 0, 0], sizes = [2, 7, 1], strides = [1, 1, 1]} : vector<2x7x14xf32> to vector<2x7x1xf32>
    %409 = vector.extract_strided_slice %407 {offsets = [0, 0, 1], sizes = [2, 7, 1], strides = [1, 1, 1]} : vector<2x7x14xf32> to vector<2x7x1xf32>
    %410 = arith.maximumf %408, %409 : vector<2x7x1xf32>
    %411 = vector.extract_strided_slice %407 {offsets = [0, 0, 2], sizes = [2, 7, 1], strides = [1, 1, 1]} : vector<2x7x14xf32> to vector<2x7x1xf32>
    %412 = vector.extract_strided_slice %407 {offsets = [0, 0, 3], sizes = [2, 7, 1], strides = [1, 1, 1]} : vector<2x7x14xf32> to vector<2x7x1xf32>
    %413 = arith.maximumf %411, %412 : vector<2x7x1xf32>
    %414 = vector.extract_strided_slice %407 {offsets = [0, 0, 4], sizes = [2, 7, 1], strides = [1, 1, 1]} : vector<2x7x14xf32> to vector<2x7x1xf32>
    %415 = vector.extract_strided_slice %407 {offsets = [0, 0, 5], sizes = [2, 7, 1], strides = [1, 1, 1]} : vector<2x7x14xf32> to vector<2x7x1xf32>
    %416 = arith.maximumf %414, %415 : vector<2x7x1xf32>
    %417 = vector.extract_strided_slice %407 {offsets = [0, 0, 6], sizes = [2, 7, 1], strides = [1, 1, 1]} : vector<2x7x14xf32> to vector<2x7x1xf32>
    %418 = vector.extract_strided_slice %407 {offsets = [0, 0, 7], sizes = [2, 7, 1], strides = [1, 1, 1]} : vector<2x7x14xf32> to vector<2x7x1xf32>
    %419 = arith.maximumf %417, %418 : vector<2x7x1xf32>
    %420 = vector.extract_strided_slice %407 {offsets = [0, 0, 8], sizes = [2, 7, 1], strides = [1, 1, 1]} : vector<2x7x14xf32> to vector<2x7x1xf32>
    %421 = vector.extract_strided_slice %407 {offsets = [0, 0, 9], sizes = [2, 7, 1], strides = [1, 1, 1]} : vector<2x7x14xf32> to vector<2x7x1xf32>
    %422 = arith.maximumf %420, %421 : vector<2x7x1xf32>
    %423 = vector.extract_strided_slice %407 {offsets = [0, 0, 10], sizes = [2, 7, 1], strides = [1, 1, 1]} : vector<2x7x14xf32> to vector<2x7x1xf32>
    %424 = vector.extract_strided_slice %407 {offsets = [0, 0, 11], sizes = [2, 7, 1], strides = [1, 1, 1]} : vector<2x7x14xf32> to vector<2x7x1xf32>
    %425 = arith.maximumf %423, %424 : vector<2x7x1xf32>
    %426 = vector.extract_strided_slice %407 {offsets = [0, 0, 12], sizes = [2, 7, 1], strides = [1, 1, 1]} : vector<2x7x14xf32> to vector<2x7x1xf32>
    %427 = vector.extract_strided_slice %407 {offsets = [0, 0, 13], sizes = [2, 7, 1], strides = [1, 1, 1]} : vector<2x7x14xf32> to vector<2x7x1xf32>
    %428 = arith.maximumf %426, %427 : vector<2x7x1xf32>
    %429 = tpu.concatenate %410, %413, %416, %419, %422, %425, %428 in 2 : vector<2x7x1xf32>, vector<2x7x1xf32>, vector<2x7x1xf32>, vector<2x7x1xf32>, vector<2x7x1xf32>, vector<2x7x1xf32>, vector<2x7x1xf32> -> vector<2x7x7xf32>
    %c5 = arith.constant 5 : index
    %430 = memref.load %arg1[%c5] : memref<54xf32, #tpu.memory_space<smem>>
    %431 = vector.broadcast %430 : f32 to vector<2x14x14xf32>
    %432 = arith.mulf %1, %431 : vector<2x14x14xf32>
    %c11 = arith.constant 11 : index
    %433 = memref.load %arg1[%c11] : memref<54xf32, #tpu.memory_space<smem>>
    %434 = vector.broadcast %433 : f32 to vector<2x14x14xf32>
    %435 = arith.mulf %2, %434 : vector<2x14x14xf32>
    %436 = arith.addf %432, %435 : vector<2x14x14xf32>
    %c17 = arith.constant 17 : index
    %437 = memref.load %arg1[%c17] : memref<54xf32, #tpu.memory_space<smem>>
    %438 = vector.broadcast %437 : f32 to vector<2x14x14xf32>
    %439 = arith.mulf %3, %438 : vector<2x14x14xf32>
    %440 = arith.addf %436, %439 : vector<2x14x14xf32>
    %c23 = arith.constant 23 : index
    %441 = memref.load %arg1[%c23] : memref<54xf32, #tpu.memory_space<smem>>
    %442 = vector.broadcast %441 : f32 to vector<2x14x14xf32>
    %443 = arith.mulf %4, %442 : vector<2x14x14xf32>
    %444 = arith.addf %440, %443 : vector<2x14x14xf32>
    %c29 = arith.constant 29 : index
    %445 = memref.load %arg1[%c29] : memref<54xf32, #tpu.memory_space<smem>>
    %446 = vector.broadcast %445 : f32 to vector<2x14x14xf32>
    %447 = arith.mulf %5, %446 : vector<2x14x14xf32>
    %448 = arith.addf %444, %447 : vector<2x14x14xf32>
    %c35 = arith.constant 35 : index
    %449 = memref.load %arg1[%c35] : memref<54xf32, #tpu.memory_space<smem>>
    %450 = vector.broadcast %449 : f32 to vector<2x14x14xf32>
    %451 = arith.mulf %6, %450 : vector<2x14x14xf32>
    %452 = arith.addf %448, %451 : vector<2x14x14xf32>
    %c41 = arith.constant 41 : index
    %453 = memref.load %arg1[%c41] : memref<54xf32, #tpu.memory_space<smem>>
    %454 = vector.broadcast %453 : f32 to vector<2x14x14xf32>
    %455 = arith.mulf %7, %454 : vector<2x14x14xf32>
    %456 = arith.addf %452, %455 : vector<2x14x14xf32>
    %c47 = arith.constant 47 : index
    %457 = memref.load %arg1[%c47] : memref<54xf32, #tpu.memory_space<smem>>
    %458 = vector.broadcast %457 : f32 to vector<2x14x14xf32>
    %459 = arith.mulf %8, %458 : vector<2x14x14xf32>
    %460 = arith.addf %456, %459 : vector<2x14x14xf32>
    %c53 = arith.constant 53 : index
    %461 = memref.load %arg1[%c53] : memref<54xf32, #tpu.memory_space<smem>>
    %462 = vector.broadcast %461 : f32 to vector<2x14x14xf32>
    %463 = arith.mulf %9, %462 : vector<2x14x14xf32>
    %464 = arith.addf %460, %463 : vector<2x14x14xf32>
    %c5_12 = arith.constant 5 : index
    %465 = memref.load %arg2[%c5_12] : memref<6xf32, #tpu.memory_space<smem>>
    %466 = vector.broadcast %465 : f32 to vector<2x14x14xf32>
    %467 = arith.addf %464, %466 : vector<2x14x14xf32>
    %cst_13 = arith.constant 0.000000e+00 : f32
    %468 = vector.broadcast %cst_13 : f32 to vector<2x14x14xf32>
    %469 = arith.maximumf %467, %468 : vector<2x14x14xf32>
    %470 = vector.extract_strided_slice %469 {offsets = [0, 0, 0], sizes = [2, 1, 14], strides = [1, 1, 1]} : vector<2x14x14xf32> to vector<2x1x14xf32>
    %471 = vector.extract_strided_slice %469 {offsets = [0, 1, 0], sizes = [2, 1, 14], strides = [1, 1, 1]} : vector<2x14x14xf32> to vector<2x1x14xf32>
    %472 = arith.maximumf %470, %471 : vector<2x1x14xf32>
    %473 = vector.extract_strided_slice %469 {offsets = [0, 2, 0], sizes = [2, 1, 14], strides = [1, 1, 1]} : vector<2x14x14xf32> to vector<2x1x14xf32>
    %474 = vector.extract_strided_slice %469 {offsets = [0, 3, 0], sizes = [2, 1, 14], strides = [1, 1, 1]} : vector<2x14x14xf32> to vector<2x1x14xf32>
    %475 = arith.maximumf %473, %474 : vector<2x1x14xf32>
    %476 = vector.extract_strided_slice %469 {offsets = [0, 4, 0], sizes = [2, 1, 14], strides = [1, 1, 1]} : vector<2x14x14xf32> to vector<2x1x14xf32>
    %477 = vector.extract_strided_slice %469 {offsets = [0, 5, 0], sizes = [2, 1, 14], strides = [1, 1, 1]} : vector<2x14x14xf32> to vector<2x1x14xf32>
    %478 = arith.maximumf %476, %477 : vector<2x1x14xf32>
    %479 = vector.extract_strided_slice %469 {offsets = [0, 6, 0], sizes = [2, 1, 14], strides = [1, 1, 1]} : vector<2x14x14xf32> to vector<2x1x14xf32>
    %480 = vector.extract_strided_slice %469 {offsets = [0, 7, 0], sizes = [2, 1, 14], strides = [1, 1, 1]} : vector<2x14x14xf32> to vector<2x1x14xf32>
    %481 = arith.maximumf %479, %480 : vector<2x1x14xf32>
    %482 = vector.extract_strided_slice %469 {offsets = [0, 8, 0], sizes = [2, 1, 14], strides = [1, 1, 1]} : vector<2x14x14xf32> to vector<2x1x14xf32>
    %483 = vector.extract_strided_slice %469 {offsets = [0, 9, 0], sizes = [2, 1, 14], strides = [1, 1, 1]} : vector<2x14x14xf32> to vector<2x1x14xf32>
    %484 = arith.maximumf %482, %483 : vector<2x1x14xf32>
    %485 = vector.extract_strided_slice %469 {offsets = [0, 10, 0], sizes = [2, 1, 14], strides = [1, 1, 1]} : vector<2x14x14xf32> to vector<2x1x14xf32>
    %486 = vector.extract_strided_slice %469 {offsets = [0, 11, 0], sizes = [2, 1, 14], strides = [1, 1, 1]} : vector<2x14x14xf32> to vector<2x1x14xf32>
    %487 = arith.maximumf %485, %486 : vector<2x1x14xf32>
    %488 = vector.extract_strided_slice %469 {offsets = [0, 12, 0], sizes = [2, 1, 14], strides = [1, 1, 1]} : vector<2x14x14xf32> to vector<2x1x14xf32>
    %489 = vector.extract_strided_slice %469 {offsets = [0, 13, 0], sizes = [2, 1, 14], strides = [1, 1, 1]} : vector<2x14x14xf32> to vector<2x1x14xf32>
    %490 = arith.maximumf %488, %489 : vector<2x1x14xf32>
    %491 = tpu.concatenate %472, %475, %478, %481, %484, %487, %490 in 1 : vector<2x1x14xf32>, vector<2x1x14xf32>, vector<2x1x14xf32>, vector<2x1x14xf32>, vector<2x1x14xf32>, vector<2x1x14xf32>, vector<2x1x14xf32> -> vector<2x7x14xf32>
    %492 = vector.extract_strided_slice %491 {offsets = [0, 0, 0], sizes = [2, 7, 1], strides = [1, 1, 1]} : vector<2x7x14xf32> to vector<2x7x1xf32>
    %493 = vector.extract_strided_slice %491 {offsets = [0, 0, 1], sizes = [2, 7, 1], strides = [1, 1, 1]} : vector<2x7x14xf32> to vector<2x7x1xf32>
    %494 = arith.maximumf %492, %493 : vector<2x7x1xf32>
    %495 = vector.extract_strided_slice %491 {offsets = [0, 0, 2], sizes = [2, 7, 1], strides = [1, 1, 1]} : vector<2x7x14xf32> to vector<2x7x1xf32>
    %496 = vector.extract_strided_slice %491 {offsets = [0, 0, 3], sizes = [2, 7, 1], strides = [1, 1, 1]} : vector<2x7x14xf32> to vector<2x7x1xf32>
    %497 = arith.maximumf %495, %496 : vector<2x7x1xf32>
    %498 = vector.extract_strided_slice %491 {offsets = [0, 0, 4], sizes = [2, 7, 1], strides = [1, 1, 1]} : vector<2x7x14xf32> to vector<2x7x1xf32>
    %499 = vector.extract_strided_slice %491 {offsets = [0, 0, 5], sizes = [2, 7, 1], strides = [1, 1, 1]} : vector<2x7x14xf32> to vector<2x7x1xf32>
    %500 = arith.maximumf %498, %499 : vector<2x7x1xf32>
    %501 = vector.extract_strided_slice %491 {offsets = [0, 0, 6], sizes = [2, 7, 1], strides = [1, 1, 1]} : vector<2x7x14xf32> to vector<2x7x1xf32>
    %502 = vector.extract_strided_slice %491 {offsets = [0, 0, 7], sizes = [2, 7, 1], strides = [1, 1, 1]} : vector<2x7x14xf32> to vector<2x7x1xf32>
    %503 = arith.maximumf %501, %502 : vector<2x7x1xf32>
    %504 = vector.extract_strided_slice %491 {offsets = [0, 0, 8], sizes = [2, 7, 1], strides = [1, 1, 1]} : vector<2x7x14xf32> to vector<2x7x1xf32>
    %505 = vector.extract_strided_slice %491 {offsets = [0, 0, 9], sizes = [2, 7, 1], strides = [1, 1, 1]} : vector<2x7x14xf32> to vector<2x7x1xf32>
    %506 = arith.maximumf %504, %505 : vector<2x7x1xf32>
    %507 = vector.extract_strided_slice %491 {offsets = [0, 0, 10], sizes = [2, 7, 1], strides = [1, 1, 1]} : vector<2x7x14xf32> to vector<2x7x1xf32>
    %508 = vector.extract_strided_slice %491 {offsets = [0, 0, 11], sizes = [2, 7, 1], strides = [1, 1, 1]} : vector<2x7x14xf32> to vector<2x7x1xf32>
    %509 = arith.maximumf %507, %508 : vector<2x7x1xf32>
    %510 = vector.extract_strided_slice %491 {offsets = [0, 0, 12], sizes = [2, 7, 1], strides = [1, 1, 1]} : vector<2x7x14xf32> to vector<2x7x1xf32>
    %511 = vector.extract_strided_slice %491 {offsets = [0, 0, 13], sizes = [2, 7, 1], strides = [1, 1, 1]} : vector<2x7x14xf32> to vector<2x7x1xf32>
    %512 = arith.maximumf %510, %511 : vector<2x7x1xf32>
    %513 = tpu.concatenate %494, %497, %500, %503, %506, %509, %512 in 2 : vector<2x7x1xf32>, vector<2x7x1xf32>, vector<2x7x1xf32>, vector<2x7x1xf32>, vector<2x7x1xf32>, vector<2x7x1xf32>, vector<2x7x1xf32> -> vector<2x7x7xf32>
    %514 = tpu.concatenate %93, %177, %261, %345, %429, %513 in 2 : vector<2x7x7xf32>, vector<2x7x7xf32>, vector<2x7x7xf32>, vector<2x7x7xf32>, vector<2x7x7xf32>, vector<2x7x7xf32> -> vector<2x7x42xf32>
    %c0_14 = arith.constant 0 : index
    %c0_15 = arith.constant 0 : index
    %c0_16 = arith.constant 0 : index
    %515 = vector.load %arg3[%c0_14, %c0_15, %c0_16] : memref<2x7x42xf32, #tpu.memory_space<vmem>>, vector<2x7x42xf32>
    tpu.vector_store %arg3[%c0_14, %c0_15, %c0_16], %514 {strides = array<i32>} : memref<2x7x42xf32, #tpu.memory_space<vmem>>, vector<2x7x42xf32>,
    return
  }
}

</mosaic_0001>

<llo_original>
// kernel: tpu_custom_call.1
$region0: #{tpu_custom_call.1}
  #allocation0 [shape = 'u32[]', space=smem, size = 0x4, offset = 0x4, fixed_abs, tag = 'smem constant byte address 0x4 - core index']
  #allocation1 [shape = 'u32[144,128]{1,0:T(1,128)}', space=vmem, size = 0x12000, scoped, tag = 'internal scratch']
  %s0 = inlined_call_operand.hbm [shape: f32[2,16,16], index: 0, kind: input, shape index: {}]
  %s1 = inlined_call_operand.vmem [shape: f32[54], index: 1, kind: input, shape index: {}]
  %s2 = inlined_call_operand.vmem [shape: f32[6], index: 2, kind: input, shape index: {}]
  %s3 = inlined_call_operand.vmem [shape: f32[2,7,42], index: 3, kind: output, shape index: {}]
  %s4 = sld [smem:[#allocation0]]
  $region34: #{tpu_custom_call.1} parent=0
    _
  %s6 = ssub.s32 1, %s4
  %s7 = scalar_select 0, %s6, %s4
  $region1: #{tpu_custom_call.1} parent=0
    #allocation2 [shape = 'u8[16384]{0}', space=vmem, size = 0x4000, scoped, tag = 'input window, operand 0, single buffered']
    #allocation3 [shape = 's32[1]{0}', space=sflag, size = 0x4, scoped, tag = 'scoped memory for tpu_custom_call.1']
    #allocation4 [shape = 's32[1]{0}', space=sflag, size = 0x4, scoped, tag = 'scoped memory for tpu_custom_call.1']
    #allocation5 [shape = 'u8[512]{0}', space=smem, size = 0x200, scoped, tag = 'input window, operand 1, single buffered']
    #allocation6 [shape = 'u8[512]{0}', space=smem, size = 0x200, scoped, tag = 'input window, operand 2, single buffered']
    #allocation7 [shape = 's32[1]{0}', space=sflag, size = 0x4, scoped, tag = 'scoped memory for tpu_custom_call.1']
    %8 = vsyncpa [#allocation3], 0
    %9 = vsyncpa [#allocation4], 0
    %10 = vsyncpa [#allocation7], 0
    // Predicated region
    $region2: #{tpu_custom_call.1} parent=1 // pred_check
      _
    $region3: #{tpu_custom_call.1} parent=1 // pred_check_branch
      %12 = sbr.rel (0) target = $region5
    $region4: #{tpu_custom_call.1} parent=1 // pred_region
      %s14 = ssub.s32 512, 512
      %15 = vsyncadd [#allocation3], %s14
      %s16 = sshll.u32 [#allocation2], 4
      %s17 = int_to_ptr.vmem [resolvable:$true] %s16
      %22 = dma.hbm_to_vmem [thread:$0]  %s0, 512, %s17, [#allocation3], 128, 128, 8
    $region5: #{tpu_custom_call.1} parent=1 // pred_fallthru
      _
    // Predicated region
    $region6: #{tpu_custom_call.1} parent=1 // pred_check
      _
    $region7: #{tpu_custom_call.1} parent=1 // pred_check_branch
      %24 = sbr.rel (0) target = $region9
    $region8: #{tpu_custom_call.1} parent=1 // pred_region
      %s26 = ssub.s32 16, 16
      %27 = vsyncadd [#allocation4], %s26
      %s29 = sshll.u32 %s1, 4
      %s30 = int_to_ptr.vmem [resolvable:$true] %s29
      %32 = dma.vmem_to_smem %s30, 16, [#allocation5], [#allocation4]
    $region9: #{tpu_custom_call.1} parent=1 // pred_fallthru
      _
    // Predicated region
    $region10: #{tpu_custom_call.1} parent=1 // pred_check
      _
    $region11: #{tpu_custom_call.1} parent=1 // pred_check_branch
      %34 = sbr.rel (0) target = $region13
    $region12: #{tpu_custom_call.1} parent=1 // pred_region
      %s36 = ssub.s32 16, 16
      %37 = vsyncadd [#allocation7], %s36
      %s39 = sshll.u32 %s2, 4
      %s40 = int_to_ptr.vmem [resolvable:$true] %s39
      %42 = dma.vmem_to_smem %s40, 16, [#allocation6], [#allocation7]
    $region13: #{tpu_custom_call.1} parent=1 // pred_fallthru
      _
    // Predicated region
    $region14: #{tpu_custom_call.1} parent=1 // pred_check
      _
    $region15: #{tpu_custom_call.1} parent=1 // pred_check_branch
      %44 = sbr.rel (0) target = $region17
    $region16: #{tpu_custom_call.1} parent=1 // pred_region
      %45 = dma.done [#allocation3], 512
    $region17: #{tpu_custom_call.1} parent=1 // pred_fallthru
      _
    // Predicated region
    $region18: #{tpu_custom_call.1} parent=1 // pred_check
      _
    $region19: #{tpu_custom_call.1} parent=1 // pred_check_branch
      %47 = sbr.rel (0) target = $region21
    $region20: #{tpu_custom_call.1} parent=1 // pred_region
      %48 = dma.done [#allocation4], 16
    $region21: #{tpu_custom_call.1} parent=1 // pred_fallthru
      _
    // Predicated region
    $region22: #{tpu_custom_call.1} parent=1 // pred_check
      _
    $region23: #{tpu_custom_call.1} parent=1 // pred_check_branch
      %50 = sbr.rel (0) target = $region25
    $region24: #{tpu_custom_call.1} parent=1 // pred_region
      %51 = dma.done [#allocation7], 16
    $region25: #{tpu_custom_call.1} parent=1 // pred_fallthru
      _
    %52 = sfence
    %v53 = vld [vmem:[#allocation2] sm:$0xff]
    %v54 = vld [vmem:[#allocation2 + $0x8] sm:$0xff]
    %v55 = vld [vmem:[#allocation2 + $0x10] sm:$0xff]
    %v56 = vld [vmem:[#allocation2 + $0x18] sm:$0xff]
    %s57 = sld [smem:[#allocation5]]
    %v58 = vstv %s57
    %v59 = vmul.f32 %v53, %v58
    %v60 = vmul.f32 %v54, %v58
    %v61 = vmul.f32 %v55, %v58
    %v62 = vmul.f32 %v56, %v58
    %s63 = sld [smem:[#allocation5 + $0x6]]
    %v64 = vstv %s63
    %v65 = vmul.f32 %v53, %v64
    %v66 = vmul.f32 %v54, %v64
    %v67 = vmul.f32 %v55, %v64
    %v68 = vmul.f32 %v56, %v64
    %73 = vrot.lane.b32.xlu0 %v65, 127
    %v74 = vpop.permute.xlu0 %73
    %75 = vrot.lane.b32.xlu0 %v66, 127
    %v76 = vpop.permute.xlu0 %75
    %77 = vrot.lane.b32.xlu0 %v67, 127
    %v78 = vpop.permute.xlu0 %77
    %79 = vrot.lane.b32.xlu0 %v68, 127
    %v80 = vpop.permute.xlu0 %79
    %v85 = vadd.f32 %v59, %v74
    %v86 = vadd.f32 %v60, %v76
    %v87 = vadd.f32 %v61, %v78
    %v88 = vadd.f32 %v62, %v80
    %s89 = sld [smem:[#allocation5 + $0xc]]
    %v90 = vstv %s89
    %v91 = vmul.f32 %v53, %v90
    %v92 = vmul.f32 %v54, %v90
    %v93 = vmul.f32 %v55, %v90
    %v94 = vmul.f32 %v56, %v90
    %99 = vrot.lane.b32.xlu0 %v91, 126
    %v100 = vpop.permute.xlu0 %99
    %101 = vrot.lane.b32.xlu0 %v92, 126
    %v102 = vpop.permute.xlu0 %101
    %103 = vrot.lane.b32.xlu0 %v93, 126
    %v104 = vpop.permute.xlu0 %103
    %105 = vrot.lane.b32.xlu0 %v94, 126
    %v106 = vpop.permute.xlu0 %105
    %v111 = vadd.f32 %v85, %v100
    %v112 = vadd.f32 %v86, %v102
    %v113 = vadd.f32 %v87, %v104
    %v114 = vadd.f32 %v88, %v106
    %s115 = sld [smem:[#allocation5 + $0x12]]
    %v116 = vstv %s115
    %v117 = vmul.f32 %v53, %v116
    %v118 = vmul.f32 %v54, %v116
    %v119 = vmul.f32 %v55, %v116
    %v120 = vmul.f32 %v56, %v116
    %vm125 = vcmask 1046528
    %v126 = vrot.slane %v117, 1
    %v127 = vrot.slane %v118, 1
    %v128 = vsel %vm125, %v126, %v127
    %v129 = vrot.slane %v119, 1
    %v130 = vrot.slane %v120, 1
    %v131 = vsel %vm125, %v129, %v130
    %v136 = vadd.f32 %v111, %v128
    %v137 = vadd.f32 %v112, %v127
    %v138 = vadd.f32 %v113, %v131
    %v139 = vadd.f32 %v114, %v130
    %s140 = sld [smem:[#allocation5 + $0x18]]
    %v141 = vstv %s140
    %v142 = vmul.f32 %v53, %v141
    %v143 = vmul.f32 %v54, %v141
    %v144 = vmul.f32 %v55, %v141
    %v145 = vmul.f32 %v56, %v141
    %v150 = vrot.slane %v142, 1
    %v151 = vrot.slane %v143, 1
    %v152 = vsel %vm125, %v150, %v151
    %v153 = vrot.slane %v144, 1
    %v154 = vrot.slane %v145, 1
    %v155 = vsel %vm125, %v153, %v154
    %156 = vrot.lane.b32.xlu0 %v152, 127
    %v157 = vpop.permute.xlu0 %156
    %158 = vrot.lane.b32.xlu0 %v151, 127
    %v159 = vpop.permute.xlu0 %158
    %160 = vrot.lane.b32.xlu0 %v155, 127
    %v161 = vpop.permute.xlu0 %160
    %162 = vrot.lane.b32.xlu0 %v154, 127
    %v163 = vpop.permute.xlu0 %162
    %v168 = vadd.f32 %v136, %v157
    %v169 = vadd.f32 %v137, %v159
    %v170 = vadd.f32 %v138, %v161
    %v171 = vadd.f32 %v139, %v163
    %s172 = sld [smem:[#allocation5 + $0x1e]]
    %v173 = vstv %s172
    %v174 = vmul.f32 %v53, %v173
    %v175 = vmul.f32 %v54, %v173
    %v176 = vmul.f32 %v55, %v173
    %v177 = vmul.f32 %v56, %v173
    %v182 = vrot.slane %v174, 1
    %v183 = vrot.slane %v175, 1
    %v184 = vsel %vm125, %v182, %v183
    %v185 = vrot.slane %v176, 1
    %v186 = vrot.slane %v177, 1
    %v187 = vsel %vm125, %v185, %v186
    %188 = vrot.lane.b32.xlu0 %v184, 126
    %v189 = vpop.permute.xlu0 %188
    %190 = vrot.lane.b32.xlu0 %v183, 126
    %v191 = vpop.permute.xlu0 %190
    %192 = vrot.lane.b32.xlu0 %v187, 126
    %v193 = vpop.permute.xlu0 %192
    %194 = vrot.lane.b32.xlu0 %v186, 126
    %v195 = vpop.permute.xlu0 %194
    %v200 = vadd.f32 %v168, %v189
    %v201 = vadd.f32 %v169, %v191
    %v202 = vadd.f32 %v170, %v193
    %v203 = vadd.f32 %v171, %v195
    %s204 = sld [smem:[#allocation5 + $0x24]]
    %v205 = vstv %s204
    %v206 = vmul.f32 %v53, %v205
    %v207 = vmul.f32 %v54, %v205
    %v208 = vmul.f32 %v55, %v205
    %v209 = vmul.f32 %v56, %v205
    %vm214 = vcmask 1045504
    %v215 = vrot.slane %v206, 2
    %v216 = vrot.slane %v207, 2
    %v217 = vsel %vm214, %v215, %v216
    %v218 = vrot.slane %v208, 2
    %v219 = vrot.slane %v209, 2
    %v220 = vsel %vm214, %v218, %v219
    %v225 = vadd.f32 %v200, %v217
    %v226 = vadd.f32 %v201, %v216
    %v227 = vadd.f32 %v202, %v220
    %v228 = vadd.f32 %v203, %v219
    %s229 = sld [smem:[#allocation5 + $0x2a]]
    %v230 = vstv %s229
    %v231 = vmul.f32 %v53, %v230
    %v232 = vmul.f32 %v54, %v230
    %v233 = vmul.f32 %v55, %v230
    %v234 = vmul.f32 %v56, %v230
    %v239 = vrot.slane %v231, 2
    %v240 = vrot.slane %v232, 2
    %v241 = vsel %vm214, %v239, %v240
    %v242 = vrot.slane %v233, 2
    %v243 = vrot.slane %v234, 2
    %v244 = vsel %vm214, %v242, %v243
    %245 = vrot.lane.b32.xlu0 %v241, 127
    %v246 = vpop.permute.xlu0 %245
    %247 = vrot.lane.b32.xlu0 %v240, 127
    %v248 = vpop.permute.xlu0 %247
    %249 = vrot.lane.b32.xlu0 %v244, 127
    %v250 = vpop.permute.xlu0 %249
    %251 = vrot.lane.b32.xlu0 %v243, 127
    %v252 = vpop.permute.xlu0 %251
    %v257 = vadd.f32 %v225, %v246
    %v258 = vadd.f32 %v226, %v248
    %v259 = vadd.f32 %v227, %v250
    %v260 = vadd.f32 %v228, %v252
    %s261 = sld [smem:[#allocation5 + $0x30]]
    %v262 = vstv %s261
    %v263 = vmul.f32 %v53, %v262
    %v264 = vmul.f32 %v54, %v262
    %v265 = vmul.f32 %v55, %v262
    %v266 = vmul.f32 %v56, %v262
    %v271 = vrot.slane %v263, 2
    %v272 = vrot.slane %v264, 2
    %v273 = vsel %vm214, %v271, %v272
    %v274 = vrot.slane %v265, 2
    %v275 = vrot.slane %v266, 2
    %v276 = vsel %vm214, %v274, %v275
    %277 = vrot.lane.b32.xlu0 %v273, 126
    %v278 = vpop.permute.xlu0 %277
    %279 = vrot.lane.b32.xlu0 %v272, 126
    %v280 = vpop.permute.xlu0 %279
    %281 = vrot.lane.b32.xlu0 %v276, 126
    %v282 = vpop.permute.xlu0 %281
    %283 = vrot.lane.b32.xlu0 %v275, 126
    %v284 = vpop.permute.xlu0 %283
    %v289 = vadd.f32 %v257, %v278
    %v290 = vadd.f32 %v258, %v280
    %v291 = vadd.f32 %v259, %v282
    %v292 = vadd.f32 %v260, %v284
    %s293 = sld [smem:[#allocation6]]
    %v294 = vstv %s293
    %v295 = vadd.f32 %v289, %v294
    %v296 = vadd.f32 %v290, %v294
    %v297 = vadd.f32 %v291, %v294
    %v298 = vadd.f32 %v292, %v294
    %v299 = vmax.f32 %v295, 0.0
    %v300 = vmax.f32 %v296, 0.0
    %v301 = vmax.f32 %v297, 0.0
    %v302 = vmax.f32 %v298, 0.0
    %v305 = vrot.slane %v299, 1
    %v306 = vrot.slane %v301, 1
    %v309 = vmax.f32 %v299, %v305
    %v310 = vmax.f32 %v301, %v306
    %v313 = vrot.slane %v300, 1
    %v314 = vrot.slane %v302, 1
    %v317 = vmax.f32 %v300, %v313
    %v318 = vmax.f32 %v302, %v314
    %v321 = vrot.slane %v309, 1
    %v322 = vrot.slane %v310, 1
    %v325 = vrot.slane %v309, 2
    %v326 = vrot.slane %v310, 2
    %v329 = vrot.slane %v309, 3
    %v330 = vrot.slane %v310, 3
    %v335 = vrot.slane %v317, 4
    %v336 = vrot.slane %v318, 4
    %v339 = vrot.slane %v317, 5
    %v340 = vrot.slane %v318, 5
    %v343 = vrot.slane %v317, 6
    %v344 = vrot.slane %v318, 6
    %vm347 = vcmask 1040384
    %v348 = vsel %vm347, %v309, %v321
    %v349 = vsel %vm347, %v310, %v322
    %vm350 = vcmask 1041408
    %v351 = vsel %vm350, %v348, %v325
    %v352 = vsel %vm350, %v349, %v326
    %vm353 = vcmask 1042432
    %v354 = vsel %vm353, %v351, %v329
    %v355 = vsel %vm353, %v352, %v330
    %vm356 = vcmask 1043456
    %v357 = vsel %vm356, %v354, %v335
    %v358 = vsel %vm356, %v355, %v336
    %vm359 = vcmask 1044480
    %v360 = vsel %vm359, %v357, %v339
    %v361 = vsel %vm359, %v358, %v340
    %v362 = vsel %vm214, %v360, %v343
    %v363 = vsel %vm214, %v361, %v344
    %366 = vrot.lane.b32.xlu0 %v362, 127
    %v367 = vpop.permute.xlu0 %366
    %368 = vrot.lane.b32.xlu0 %v363, 127
    %v369 = vpop.permute.xlu0 %368
    %v372 = vmax.f32 %v362, %v367
    %v373 = vmax.f32 %v363, %v369
    %376 = vrot.lane.b32.xlu0 %v372, 127
    %v377 = vpop.permute.xlu0 %376
    %378 = vrot.lane.b32.xlu0 %v373, 127
    %v379 = vpop.permute.xlu0 %378
    %382 = vrot.lane.b32.xlu0 %v372, 126
    %v383 = vpop.permute.xlu0 %382
    %384 = vrot.lane.b32.xlu0 %v373, 126
    %v385 = vpop.permute.xlu0 %384
    %388 = vrot.lane.b32.xlu0 %v372, 125
    %v389 = vpop.permute.xlu0 %388
    %390 = vrot.lane.b32.xlu0 %v373, 125
    %v391 = vpop.permute.xlu0 %390
    %394 = vrot.lane.b32.xlu0 %v372, 124
    %v395 = vpop.permute.xlu0 %394
    %396 = vrot.lane.b32.xlu0 %v373, 124
    %v397 = vpop.permute.xlu0 %396
    %400 = vrot.lane.b32.xlu0 %v372, 123
    %v401 = vpop.permute.xlu0 %400
    %402 = vrot.lane.b32.xlu0 %v373, 123
    %v403 = vpop.permute.xlu0 %402
    %406 = vrot.lane.b32.xlu0 %v372, 122
    %v407 = vpop.permute.xlu0 %406
    %408 = vrot.lane.b32.xlu0 %v373, 122
    %v409 = vpop.permute.xlu0 %408
    %vm412 = vcmask 7168
    %v413 = vsel %vm412, %v372, %v377
    %v414 = vsel %vm412, %v373, %v379
    %vm415 = vcmask 15360
    %v416 = vsel %vm415, %v413, %v383
    %v417 = vsel %vm415, %v414, %v385
    %vm418 = vcmask 23552
    %v419 = vsel %vm418, %v416, %v389
    %v420 = vsel %vm418, %v417, %v391
    %vm421 = vcmask 31744
    %v422 = vsel %vm421, %v419, %v395
    %v423 = vsel %vm421, %v420, %v397
    %vm424 = vcmask 39936
    %v425 = vsel %vm424, %v422, %v401
    %v426 = vsel %vm424, %v423, %v403
    %vm427 = vcmask 48128
    %v428 = vsel %vm427, %v425, %v407
    %v429 = vsel %vm427, %v426, %v409
    %s430 = sld [smem:[#allocation5 + $0x1]]
    %v431 = vstv %s430
    %v432 = vmul.f32 %v53, %v431
    %v433 = vmul.f32 %v54, %v431
    %v434 = vmul.f32 %v55, %v431
    %v435 = vmul.f32 %v56, %v431
    %s436 = sld [smem:[#allocation5 + $0x7]]
    %v437 = vstv %s436
    %v438 = vmul.f32 %v53, %v437
    %v439 = vmul.f32 %v54, %v437
    %v440 = vmul.f32 %v55, %v437
    %v441 = vmul.f32 %v56, %v437
    %446 = vrot.lane.b32.xlu0 %v438, 127
    %v447 = vpop.permute.xlu0 %446
    %448 = vrot.lane.b32.xlu0 %v439, 127
    %v449 = vpop.permute.xlu0 %448
    %450 = vrot.lane.b32.xlu0 %v440, 127
    %v451 = vpop.permute.xlu0 %450
    %452 = vrot.lane.b32.xlu0 %v441, 127
    %v453 = vpop.permute.xlu0 %452
    %v458 = vadd.f32 %v432, %v447
    %v459 = vadd.f32 %v433, %v449
    %v460 = vadd.f32 %v434, %v451
    %v461 = vadd.f32 %v435, %v453
    %s462 = sld [smem:[#allocation5 + $0xd]]
    %v463 = vstv %s462
    %v464 = vmul.f32 %v53, %v463
    %v465 = vmul.f32 %v54, %v463
    %v466 = vmul.f32 %v55, %v463
    %v467 = vmul.f32 %v56, %v463
    %472 = vrot.lane.b32.xlu0 %v464, 126
    %v473 = vpop.permute.xlu0 %472
    %474 = vrot.lane.b32.xlu0 %v465, 126
    %v475 = vpop.permute.xlu0 %474
    %476 = vrot.lane.b32.xlu0 %v466, 126
    %v477 = vpop.permute.xlu0 %476
    %478 = vrot.lane.b32.xlu0 %v467, 126
    %v479 = vpop.permute.xlu0 %478
    %v484 = vadd.f32 %v458, %v473
    %v485 = vadd.f32 %v459, %v475
    %v486 = vadd.f32 %v460, %v477
    %v487 = vadd.f32 %v461, %v479
    %s488 = sld [smem:[#allocation5 + $0x13]]
    %v489 = vstv %s488
    %v490 = vmul.f32 %v53, %v489
    %v491 = vmul.f32 %v54, %v489
    %v492 = vmul.f32 %v55, %v489
    %v493 = vmul.f32 %v56, %v489
    %v498 = vrot.slane %v490, 1
    %v499 = vrot.slane %v491, 1
    %v500 = vsel %vm125, %v498, %v499
    %v501 = vrot.slane %v492, 1
    %v502 = vrot.slane %v493, 1
    %v503 = vsel %vm125, %v501, %v502
    %v508 = vadd.f32 %v484, %v500
    %v509 = vadd.f32 %v485, %v499
    %v510 = vadd.f32 %v486, %v503
    %v511 = vadd.f32 %v487, %v502
    %s512 = sld [smem:[#allocation5 + $0x19]]
    %v513 = vstv %s512
    %v514 = vmul.f32 %v53, %v513
    %v515 = vmul.f32 %v54, %v513
    %v516 = vmul.f32 %v55, %v513
    %v517 = vmul.f32 %v56, %v513
    %v522 = vrot.slane %v514, 1
    %v523 = vrot.slane %v515, 1
    %v524 = vsel %vm125, %v522, %v523
    %v525 = vrot.slane %v516, 1
    %v526 = vrot.slane %v517, 1
    %v527 = vsel %vm125, %v525, %v526
    %528 = vrot.lane.b32.xlu0 %v524, 127
    %v529 = vpop.permute.xlu0 %528
    %530 = vrot.lane.b32.xlu0 %v523, 127
    %v531 = vpop.permute.xlu0 %530
    %532 = vrot.lane.b32.xlu0 %v527, 127
    %v533 = vpop.permute.xlu0 %532
    %534 = vrot.lane.b32.xlu0 %v526, 127
    %v535 = vpop.permute.xlu0 %534
    %v540 = vadd.f32 %v508, %v529
    %v541 = vadd.f32 %v509, %v531
    %v542 = vadd.f32 %v510, %v533
    %v543 = vadd.f32 %v511, %v535
    %s544 = sld [smem:[#allocation5 + $0x1f]]
    %v545 = vstv %s544
    %v546 = vmul.f32 %v53, %v545
    %v547 = vmul.f32 %v54, %v545
    %v548 = vmul.f32 %v55, %v545
    %v549 = vmul.f32 %v56, %v545
    %v554 = vrot.slane %v546, 1
    %v555 = vrot.slane %v547, 1
    %v556 = vsel %vm125, %v554, %v555
    %v557 = vrot.slane %v548, 1
    %v558 = vrot.slane %v549, 1
    %v559 = vsel %vm125, %v557, %v558
    %560 = vrot.lane.b32.xlu0 %v556, 126
    %v561 = vpop.permute.xlu0 %560
    %562 = vrot.lane.b32.xlu0 %v555, 126
    %v563 = vpop.permute.xlu0 %562
    %564 = vrot.lane.b32.xlu0 %v559, 126
    %v565 = vpop.permute.xlu0 %564
    %566 = vrot.lane.b32.xlu0 %v558, 126
    %v567 = vpop.permute.xlu0 %566
    %v572 = vadd.f32 %v540, %v561
    %v573 = vadd.f32 %v541, %v563
    %v574 = vadd.f32 %v542, %v565
    %v575 = vadd.f32 %v543, %v567
    %s576 = sld [smem:[#allocation5 + $0x25]]
    %v577 = vstv %s576
    %v578 = vmul.f32 %v53, %v577
    %v579 = vmul.f32 %v54, %v577
    %v580 = vmul.f32 %v55, %v577
    %v581 = vmul.f32 %v56, %v577
    %v586 = vrot.slane %v578, 2
    %v587 = vrot.slane %v579, 2
    %v588 = vsel %vm214, %v586, %v587
    %v589 = vrot.slane %v580, 2
    %v590 = vrot.slane %v581, 2
    %v591 = vsel %vm214, %v589, %v590
    %v596 = vadd.f32 %v572, %v588
    %v597 = vadd.f32 %v573, %v587
    %v598 = vadd.f32 %v574, %v591
    %v599 = vadd.f32 %v575, %v590
    %s600 = sld [smem:[#allocation5 + $0x2b]]
    %v601 = vstv %s600
    %v602 = vmul.f32 %v53, %v601
    %v603 = vmul.f32 %v54, %v601
    %v604 = vmul.f32 %v55, %v601
    %v605 = vmul.f32 %v56, %v601
    %v610 = vrot.slane %v602, 2
    %v611 = vrot.slane %v603, 2
    %v612 = vsel %vm214, %v610, %v611
    %v613 = vrot.slane %v604, 2
    %v614 = vrot.slane %v605, 2
    %v615 = vsel %vm214, %v613, %v614
    %616 = vrot.lane.b32.xlu0 %v612, 127
    %v617 = vpop.permute.xlu0 %616
    %618 = vrot.lane.b32.xlu0 %v611, 127
    %v619 = vpop.permute.xlu0 %618
    %620 = vrot.lane.b32.xlu0 %v615, 127
    %v621 = vpop.permute.xlu0 %620
    %622 = vrot.lane.b32.xlu0 %v614, 127
    %v623 = vpop.permute.xlu0 %622
    %v628 = vadd.f32 %v596, %v617
    %v629 = vadd.f32 %v597, %v619
    %v630 = vadd.f32 %v598, %v621
    %v631 = vadd.f32 %v599, %v623
    %s632 = sld [smem:[#allocation5 + $0x31]]
    %v633 = vstv %s632
    %v634 = vmul.f32 %v53, %v633
    %v635 = vmul.f32 %v54, %v633
    %v636 = vmul.f32 %v55, %v633
    %v637 = vmul.f32 %v56, %v633
    %v642 = vrot.slane %v634, 2
    %v643 = vrot.slane %v635, 2
    %v644 = vsel %vm214, %v642, %v643
    %v645 = vrot.slane %v636, 2
    %v646 = vrot.slane %v637, 2
    %v647 = vsel %vm214, %v645, %v646
    %648 = vrot.lane.b32.xlu0 %v644, 126
    %v649 = vpop.permute.xlu0 %648
    %650 = vrot.lane.b32.xlu0 %v643, 126
    %v651 = vpop.permute.xlu0 %650
    %652 = vrot.lane.b32.xlu0 %v647, 126
    %v653 = vpop.permute.xlu0 %652
    %654 = vrot.lane.b32.xlu0 %v646, 126
    %v655 = vpop.permute.xlu0 %654
    %v660 = vadd.f32 %v628, %v649
    %v661 = vadd.f32 %v629, %v651
    %v662 = vadd.f32 %v630, %v653
    %v663 = vadd.f32 %v631, %v655
    %s664 = sld [smem:[#allocation6 + $0x1]]
    %v665 = vstv %s664
    %v666 = vadd.f32 %v660, %v665
    %v667 = vadd.f32 %v661, %v665
    %v668 = vadd.f32 %v662, %v665
    %v669 = vadd.f32 %v663, %v665
    %v670 = vmax.f32 %v666, 0.0
    %v671 = vmax.f32 %v667, 0.0
    %v672 = vmax.f32 %v668, 0.0
    %v673 = vmax.f32 %v669, 0.0
    %v676 = vrot.slane %v670, 1
    %v677 = vrot.slane %v672, 1
    %v680 = vmax.f32 %v670, %v676
    %v681 = vmax.f32 %v672, %v677
    %v684 = vrot.slane %v671, 1
    %v685 = vrot.slane %v673, 1
    %v688 = vmax.f32 %v671, %v684
    %v689 = vmax.f32 %v673, %v685
    %v692 = vrot.slane %v680, 1
    %v693 = vrot.slane %v681, 1
    %v696 = vrot.slane %v680, 2
    %v697 = vrot.slane %v681, 2
    %v700 = vrot.slane %v680, 3
    %v701 = vrot.slane %v681, 3
    %v706 = vrot.slane %v688, 4
    %v707 = vrot.slane %v689, 4
    %v710 = vrot.slane %v688, 5
    %v711 = vrot.slane %v689, 5
    %v714 = vrot.slane %v688, 6
    %v715 = vrot.slane %v689, 6
    %v718 = vsel %vm347, %v680, %v692
    %v719 = vsel %vm347, %v681, %v693
    %v720 = vsel %vm350, %v718, %v696
    %v721 = vsel %vm350, %v719, %v697
    %v722 = vsel %vm353, %v720, %v700
    %v723 = vsel %vm353, %v721, %v701
    %v724 = vsel %vm356, %v722, %v706
    %v725 = vsel %vm356, %v723, %v707
    %v726 = vsel %vm359, %v724, %v710
    %v727 = vsel %vm359, %v725, %v711
    %v728 = vsel %vm214, %v726, %v714
    %v729 = vsel %vm214, %v727, %v715
    %732 = vrot.lane.b32.xlu0 %v728, 127
    %v733 = vpop.permute.xlu0 %732
    %734 = vrot.lane.b32.xlu0 %v729, 127
    %v735 = vpop.permute.xlu0 %734
    %v738 = vmax.f32 %v728, %v733
    %v739 = vmax.f32 %v729, %v735
    %742 = vrot.lane.b32.xlu0 %v738, 127
    %v743 = vpop.permute.xlu0 %742
    %744 = vrot.lane.b32.xlu0 %v739, 127
    %v745 = vpop.permute.xlu0 %744
    %748 = vrot.lane.b32.xlu0 %v738, 126
    %v749 = vpop.permute.xlu0 %748
    %750 = vrot.lane.b32.xlu0 %v739, 126
    %v751 = vpop.permute.xlu0 %750
    %754 = vrot.lane.b32.xlu0 %v738, 125
    %v755 = vpop.permute.xlu0 %754
    %756 = vrot.lane.b32.xlu0 %v739, 125
    %v757 = vpop.permute.xlu0 %756
    %760 = vrot.lane.b32.xlu0 %v738, 124
    %v761 = vpop.permute.xlu0 %760
    %762 = vrot.lane.b32.xlu0 %v739, 124
    %v763 = vpop.permute.xlu0 %762
    %766 = vrot.lane.b32.xlu0 %v738, 123
    %v767 = vpop.permute.xlu0 %766
    %768 = vrot.lane.b32.xlu0 %v739, 123
    %v769 = vpop.permute.xlu0 %768
    %772 = vrot.lane.b32.xlu0 %v738, 122
    %v773 = vpop.permute.xlu0 %772
    %774 = vrot.lane.b32.xlu0 %v739, 122
    %v775 = vpop.permute.xlu0 %774
    %v778 = vsel %vm412, %v738, %v743
    %v779 = vsel %vm412, %v739, %v745
    %v780 = vsel %vm415, %v778, %v749
    %v781 = vsel %vm415, %v779, %v751
    %v782 = vsel %vm418, %v780, %v755
    %v783 = vsel %vm418, %v781, %v757
    %v784 = vsel %vm421, %v782, %v761
    %v785 = vsel %vm421, %v783, %v763
    %v786 = vsel %vm424, %v784, %v767
    %v787 = vsel %vm424, %v785, %v769
    %v788 = vsel %vm427, %v786, %v773
    %v789 = vsel %vm427, %v787, %v775
    %s790 = sld [smem:[#allocation5 + $0x2]]
    %v791 = vstv %s790
    %v792 = vmul.f32 %v53, %v791
    %v793 = vmul.f32 %v54, %v791
    %v794 = vmul.f32 %v55, %v791
    %v795 = vmul.f32 %v56, %v791
    %s796 = sld [smem:[#allocation5 + $0x8]]
    %v797 = vstv %s796
    %v798 = vmul.f32 %v53, %v797
    %v799 = vmul.f32 %v54, %v797
    %v800 = vmul.f32 %v55, %v797
    %v801 = vmul.f32 %v56, %v797
    %806 = vrot.lane.b32.xlu0 %v798, 127
    %v807 = vpop.permute.xlu0 %806
    %808 = vrot.lane.b32.xlu0 %v799, 127
    %v809 = vpop.permute.xlu0 %808
    %810 = vrot.lane.b32.xlu0 %v800, 127
    %v811 = vpop.permute.xlu0 %810
    %812 = vrot.lane.b32.xlu0 %v801, 127
    %v813 = vpop.permute.xlu0 %812
    %v818 = vadd.f32 %v792, %v807
    %v819 = vadd.f32 %v793, %v809
    %v820 = vadd.f32 %v794, %v811
    %v821 = vadd.f32 %v795, %v813
    %s822 = sld [smem:[#allocation5 + $0xe]]
    %v823 = vstv %s822
    %v824 = vmul.f32 %v53, %v823
    %v825 = vmul.f32 %v54, %v823
    %v826 = vmul.f32 %v55, %v823
    %v827 = vmul.f32 %v56, %v823
    %832 = vrot.lane.b32.xlu0 %v824, 126
    %v833 = vpop.permute.xlu0 %832
    %834 = vrot.lane.b32.xlu0 %v825, 126
    %v835 = vpop.permute.xlu0 %834
    %836 = vrot.lane.b32.xlu0 %v826, 126
    %v837 = vpop.permute.xlu0 %836
    %838 = vrot.lane.b32.xlu0 %v827, 126
    %v839 = vpop.permute.xlu0 %838
    %v844 = vadd.f32 %v818, %v833
    %v845 = vadd.f32 %v819, %v835
    %v846 = vadd.f32 %v820, %v837
    %v847 = vadd.f32 %v821, %v839
    %s848 = sld [smem:[#allocation5 + $0x14]]
    %v849 = vstv %s848
    %v850 = vmul.f32 %v53, %v849
    %v851 = vmul.f32 %v54, %v849
    %v852 = vmul.f32 %v55, %v849
    %v853 = vmul.f32 %v56, %v849
    %v858 = vrot.slane %v850, 1
    %v859 = vrot.slane %v851, 1
    %v860 = vsel %vm125, %v858, %v859
    %v861 = vrot.slane %v852, 1
    %v862 = vrot.slane %v853, 1
    %v863 = vsel %vm125, %v861, %v862
    %v868 = vadd.f32 %v844, %v860
    %v869 = vadd.f32 %v845, %v859
    %v870 = vadd.f32 %v846, %v863
    %v871 = vadd.f32 %v847, %v862
    %s872 = sld [smem:[#allocation5 + $0x1a]]
    %v873 = vstv %s872
    %v874 = vmul.f32 %v53, %v873
    %v875 = vmul.f32 %v54, %v873
    %v876 = vmul.f32 %v55, %v873
    %v877 = vmul.f32 %v56, %v873
    %v882 = vrot.slane %v874, 1
    %v883 = vrot.slane %v875, 1
    %v884 = vsel %vm125, %v882, %v883
    %v885 = vrot.slane %v876, 1
    %v886 = vrot.slane %v877, 1
    %v887 = vsel %vm125, %v885, %v886
    %888 = vrot.lane.b32.xlu0 %v884, 127
    %v889 = vpop.permute.xlu0 %888
    %890 = vrot.lane.b32.xlu0 %v883, 127
    %v891 = vpop.permute.xlu0 %890
    %892 = vrot.lane.b32.xlu0 %v887, 127
    %v893 = vpop.permute.xlu0 %892
    %894 = vrot.lane.b32.xlu0 %v886, 127
    %v895 = vpop.permute.xlu0 %894
    %v900 = vadd.f32 %v868, %v889
    %v901 = vadd.f32 %v869, %v891
    %v902 = vadd.f32 %v870, %v893
    %v903 = vadd.f32 %v871, %v895
    %s904 = sld [smem:[#allocation5 + $0x20]]
    %v905 = vstv %s904
    %v906 = vmul.f32 %v53, %v905
    %v907 = vmul.f32 %v54, %v905
    %v908 = vmul.f32 %v55, %v905
    %v909 = vmul.f32 %v56, %v905
    %v914 = vrot.slane %v906, 1
    %v915 = vrot.slane %v907, 1
    %v916 = vsel %vm125, %v914, %v915
    %v917 = vrot.slane %v908, 1
    %v918 = vrot.slane %v909, 1
    %v919 = vsel %vm125, %v917, %v918
    %920 = vrot.lane.b32.xlu0 %v916, 126
    %v921 = vpop.permute.xlu0 %920
    %922 = vrot.lane.b32.xlu0 %v915, 126
    %v923 = vpop.permute.xlu0 %922
    %924 = vrot.lane.b32.xlu0 %v919, 126
    %v925 = vpop.permute.xlu0 %924
    %926 = vrot.lane.b32.xlu0 %v918, 126
    %v927 = vpop.permute.xlu0 %926
    %v932 = vadd.f32 %v900, %v921
    %v933 = vadd.f32 %v901, %v923
    %v934 = vadd.f32 %v902, %v925
    %v935 = vadd.f32 %v903, %v927
    %s936 = sld [smem:[#allocation5 + $0x26]]
    %v937 = vstv %s936
    %v938 = vmul.f32 %v53, %v937
    %v939 = vmul.f32 %v54, %v937
    %v940 = vmul.f32 %v55, %v937
    %v941 = vmul.f32 %v56, %v937
    %v946 = vrot.slane %v938, 2
    %v947 = vrot.slane %v939, 2
    %v948 = vsel %vm214, %v946, %v947
    %v949 = vrot.slane %v940, 2
    %v950 = vrot.slane %v941, 2
    %v951 = vsel %vm214, %v949, %v950
    %v956 = vadd.f32 %v932, %v948
    %v957 = vadd.f32 %v933, %v947
    %v958 = vadd.f32 %v934, %v951
    %v959 = vadd.f32 %v935, %v950
    %s960 = sld [smem:[#allocation5 + $0x2c]]
    %v961 = vstv %s960
    %v962 = vmul.f32 %v53, %v961
    %v963 = vmul.f32 %v54, %v961
    %v964 = vmul.f32 %v55, %v961
    %v965 = vmul.f32 %v56, %v961
    %v970 = vrot.slane %v962, 2
    %v971 = vrot.slane %v963, 2
    %v972 = vsel %vm214, %v970, %v971
    %v973 = vrot.slane %v964, 2
    %v974 = vrot.slane %v965, 2
    %v975 = vsel %vm214, %v973, %v974
    %976 = vrot.lane.b32.xlu0 %v972, 127
    %v977 = vpop.permute.xlu0 %976
    %978 = vrot.lane.b32.xlu0 %v971, 127
    %v979 = vpop.permute.xlu0 %978
    %980 = vrot.lane.b32.xlu0 %v975, 127
    %v981 = vpop.permute.xlu0 %980
    %982 = vrot.lane.b32.xlu0 %v974, 127
    %v983 = vpop.permute.xlu0 %982
    %v988 = vadd.f32 %v956, %v977
    %v989 = vadd.f32 %v957, %v979
    %v990 = vadd.f32 %v958, %v981
    %v991 = vadd.f32 %v959, %v983
    %s992 = sld [smem:[#allocation5 + $0x32]]
    %v993 = vstv %s992
    %v994 = vmul.f32 %v53, %v993
    %v995 = vmul.f32 %v54, %v993
    %v996 = vmul.f32 %v55, %v993
    %v997 = vmul.f32 %v56, %v993
    %v1002 = vrot.slane %v994, 2
    %v1003 = vrot.slane %v995, 2
    %v1004 = vsel %vm214, %v1002, %v1003
    %v1005 = vrot.slane %v996, 2
    %v1006 = vrot.slane %v997, 2
    %v1007 = vsel %vm214, %v1005, %v1006
    %1008 = vrot.lane.b32.xlu0 %v1004, 126
    %v1009 = vpop.permute.xlu0 %1008
    %1010 = vrot.lane.b32.xlu0 %v1003, 126
    %v1011 = vpop.permute.xlu0 %1010
    %1012 = vrot.lane.b32.xlu0 %v1007, 126
    %v1013 = vpop.permute.xlu0 %1012
    %1014 = vrot.lane.b32.xlu0 %v1006, 126
    %v1015 = vpop.permute.xlu0 %1014
    %v1020 = vadd.f32 %v988, %v1009
    %v1021 = vadd.f32 %v989, %v1011
    %v1022 = vadd.f32 %v990, %v1013
    %v1023 = vadd.f32 %v991, %v1015
    %s1024 = sld [smem:[#allocation6 + $0x2]]
    %v1025 = vstv %s1024
    %v1026 = vadd.f32 %v1020, %v1025
    %v1027 = vadd.f32 %v1021, %v1025
    %v1028 = vadd.f32 %v1022, %v1025
    %v1029 = vadd.f32 %v1023, %v1025
    %v1030 = vmax.f32 %v1026, 0.0
    %v1031 = vmax.f32 %v1027, 0.0
    %v1032 = vmax.f32 %v1028, 0.0
    %v1033 = vmax.f32 %v1029, 0.0
    %v1036 = vrot.slane %v1030, 1
    %v1037 = vrot.slane %v1032, 1
    %v1040 = vmax.f32 %v1030, %v1036
    %v1041 = vmax.f32 %v1032, %v1037
    %v1044 = vrot.slane %v1031, 1
    %v1045 = vrot.slane %v1033, 1
    %v1048 = vmax.f32 %v1031, %v1044
    %v1049 = vmax.f32 %v1033, %v1045
    %v1052 = vrot.slane %v1040, 1
    %v1053 = vrot.slane %v1041, 1
    %v1056 = vrot.slane %v1040, 2
    %v1057 = vrot.slane %v1041, 2
    %v1060 = vrot.slane %v1040, 3
    %v1061 = vrot.slane %v1041, 3
    %v1066 = vrot.slane %v1048, 4
    %v1067 = vrot.slane %v1049, 4
    %v1070 = vrot.slane %v1048, 5
    %v1071 = vrot.slane %v1049, 5
    %v1074 = vrot.slane %v1048, 6
    %v1075 = vrot.slane %v1049, 6
    %v1078 = vsel %vm347, %v1040, %v1052
    %v1079 = vsel %vm347, %v1041, %v1053
    %v1080 = vsel %vm350, %v1078, %v1056
    %v1081 = vsel %vm350, %v1079, %v1057
    %v1082 = vsel %vm353, %v1080, %v1060
    %v1083 = vsel %vm353, %v1081, %v1061
    %v1084 = vsel %vm356, %v1082, %v1066
    %v1085 = vsel %vm356, %v1083, %v1067
    %v1086 = vsel %vm359, %v1084, %v1070
    %v1087 = vsel %vm359, %v1085, %v1071
    %v1088 = vsel %vm214, %v1086, %v1074
    %v1089 = vsel %vm214, %v1087, %v1075
    %1092 = vrot.lane.b32.xlu0 %v1088, 127
    %v1093 = vpop.permute.xlu0 %1092
    %1094 = vrot.lane.b32.xlu0 %v1089, 127
    %v1095 = vpop.permute.xlu0 %1094
    %v1098 = vmax.f32 %v1088, %v1093
    %v1099 = vmax.f32 %v1089, %v1095
    %1102 = vrot.lane.b32.xlu0 %v1098, 127
    %v1103 = vpop.permute.xlu0 %1102
    %1104 = vrot.lane.b32.xlu0 %v1099, 127
    %v1105 = vpop.permute.xlu0 %1104
    %1108 = vrot.lane.b32.xlu0 %v1098, 126
    %v1109 = vpop.permute.xlu0 %1108
    %1110 = vrot.lane.b32.xlu0 %v1099, 126
    %v1111 = vpop.permute.xlu0 %1110
    %1114 = vrot.lane.b32.xlu0 %v1098, 125
    %v1115 = vpop.permute.xlu0 %1114
    %1116 = vrot.lane.b32.xlu0 %v1099, 125
    %v1117 = vpop.permute.xlu0 %1116
    %1120 = vrot.lane.b32.xlu0 %v1098, 124
    %v1121 = vpop.permute.xlu0 %1120
    %1122 = vrot.lane.b32.xlu0 %v1099, 124
    %v1123 = vpop.permute.xlu0 %1122
    %1126 = vrot.lane.b32.xlu0 %v1098, 123
    %v1127 = vpop.permute.xlu0 %1126
    %1128 = vrot.lane.b32.xlu0 %v1099, 123
    %v1129 = vpop.permute.xlu0 %1128
    %1132 = vrot.lane.b32.xlu0 %v1098, 122
    %v1133 = vpop.permute.xlu0 %1132
    %1134 = vrot.lane.b32.xlu0 %v1099, 122
    %v1135 = vpop.permute.xlu0 %1134
    %v1138 = vsel %vm412, %v1098, %v1103
    %v1139 = vsel %vm412, %v1099, %v1105
    %v1140 = vsel %vm415, %v1138, %v1109
    %v1141 = vsel %vm415, %v1139, %v1111
    %v1142 = vsel %vm418, %v1140, %v1115
    %v1143 = vsel %vm418, %v1141, %v1117
    %v1144 = vsel %vm421, %v1142, %v1121
    %v1145 = vsel %vm421, %v1143, %v1123
    %v1146 = vsel %vm424, %v1144, %v1127
    %v1147 = vsel %vm424, %v1145, %v1129
    %v1148 = vsel %vm427, %v1146, %v1133
    %v1149 = vsel %vm427, %v1147, %v1135
    %s1150 = sld [smem:[#allocation5 + $0x3]]
    %v1151 = vstv %s1150
    %v1152 = vmul.f32 %v53, %v1151
    %v1153 = vmul.f32 %v54, %v1151
    %v1154 = vmul.f32 %v55, %v1151
    %v1155 = vmul.f32 %v56, %v1151
    %s1156 = sld [smem:[#allocation5 + $0x9]]
    %v1157 = vstv %s1156
    %v1158 = vmul.f32 %v53, %v1157
    %v1159 = vmul.f32 %v54, %v1157
    %v1160 = vmul.f32 %v55, %v1157
    %v1161 = vmul.f32 %v56, %v1157
    %1166 = vrot.lane.b32.xlu0 %v1158, 127
    %v1167 = vpop.permute.xlu0 %1166
    %1168 = vrot.lane.b32.xlu0 %v1159, 127
    %v1169 = vpop.permute.xlu0 %1168
    %1170 = vrot.lane.b32.xlu0 %v1160, 127
    %v1171 = vpop.permute.xlu0 %1170
    %1172 = vrot.lane.b32.xlu0 %v1161, 127
    %v1173 = vpop.permute.xlu0 %1172
    %v1178 = vadd.f32 %v1152, %v1167
    %v1179 = vadd.f32 %v1153, %v1169
    %v1180 = vadd.f32 %v1154, %v1171
    %v1181 = vadd.f32 %v1155, %v1173
    %s1182 = sld [smem:[#allocation5 + $0xf]]
    %v1183 = vstv %s1182
    %v1184 = vmul.f32 %v53, %v1183
    %v1185 = vmul.f32 %v54, %v1183
    %v1186 = vmul.f32 %v55, %v1183
    %v1187 = vmul.f32 %v56, %v1183
    %1192 = vrot.lane.b32.xlu0 %v1184, 126
    %v1193 = vpop.permute.xlu0 %1192
    %1194 = vrot.lane.b32.xlu0 %v1185, 126
    %v1195 = vpop.permute.xlu0 %1194
    %1196 = vrot.lane.b32.xlu0 %v1186, 126
    %v1197 = vpop.permute.xlu0 %1196
    %1198 = vrot.lane.b32.xlu0 %v1187, 126
    %v1199 = vpop.permute.xlu0 %1198
    %v1204 = vadd.f32 %v1178, %v1193
    %v1205 = vadd.f32 %v1179, %v1195
    %v1206 = vadd.f32 %v1180, %v1197
    %v1207 = vadd.f32 %v1181, %v1199
    %s1208 = sld [smem:[#allocation5 + $0x15]]
    %v1209 = vstv %s1208
    %v1210 = vmul.f32 %v53, %v1209
    %v1211 = vmul.f32 %v54, %v1209
    %v1212 = vmul.f32 %v55, %v1209
    %v1213 = vmul.f32 %v56, %v1209
    %v1218 = vrot.slane %v1210, 1
    %v1219 = vrot.slane %v1211, 1
    %v1220 = vsel %vm125, %v1218, %v1219
    %v1221 = vrot.slane %v1212, 1
    %v1222 = vrot.slane %v1213, 1
    %v1223 = vsel %vm125, %v1221, %v1222
    %v1228 = vadd.f32 %v1204, %v1220
    %v1229 = vadd.f32 %v1205, %v1219
    %v1230 = vadd.f32 %v1206, %v1223
    %v1231 = vadd.f32 %v1207, %v1222
    %s1232 = sld [smem:[#allocation5 + $0x1b]]
    %v1233 = vstv %s1232
    %v1234 = vmul.f32 %v53, %v1233
    %v1235 = vmul.f32 %v54, %v1233
    %v1236 = vmul.f32 %v55, %v1233
    %v1237 = vmul.f32 %v56, %v1233
    %v1242 = vrot.slane %v1234, 1
    %v1243 = vrot.slane %v1235, 1
    %v1244 = vsel %vm125, %v1242, %v1243
    %v1245 = vrot.slane %v1236, 1
    %v1246 = vrot.slane %v1237, 1
    %v1247 = vsel %vm125, %v1245, %v1246
    %1248 = vrot.lane.b32.xlu0 %v1244, 127
    %v1249 = vpop.permute.xlu0 %1248
    %1250 = vrot.lane.b32.xlu0 %v1243, 127
    %v1251 = vpop.permute.xlu0 %1250
    %1252 = vrot.lane.b32.xlu0 %v1247, 127
    %v1253 = vpop.permute.xlu0 %1252
    %1254 = vrot.lane.b32.xlu0 %v1246, 127
    %v1255 = vpop.permute.xlu0 %1254
    %v1260 = vadd.f32 %v1228, %v1249
    %v1261 = vadd.f32 %v1229, %v1251
    %v1262 = vadd.f32 %v1230, %v1253
    %v1263 = vadd.f32 %v1231, %v1255
    %s1264 = sld [smem:[#allocation5 + $0x21]]
    %v1265 = vstv %s1264
    %v1266 = vmul.f32 %v53, %v1265
    %v1267 = vmul.f32 %v54, %v1265
    %v1268 = vmul.f32 %v55, %v1265
    %v1269 = vmul.f32 %v56, %v1265
    %v1274 = vrot.slane %v1266, 1
    %v1275 = vrot.slane %v1267, 1
    %v1276 = vsel %vm125, %v1274, %v1275
    %v1277 = vrot.slane %v1268, 1
    %v1278 = vrot.slane %v1269, 1
    %v1279 = vsel %vm125, %v1277, %v1278
    %1280 = vrot.lane.b32.xlu0 %v1276, 126
    %v1281 = vpop.permute.xlu0 %1280
    %1282 = vrot.lane.b32.xlu0 %v1275, 126
    %v1283 = vpop.permute.xlu0 %1282
    %1284 = vrot.lane.b32.xlu0 %v1279, 126
    %v1285 = vpop.permute.xlu0 %1284
    %1286 = vrot.lane.b32.xlu0 %v1278, 126
    %v1287 = vpop.permute.xlu0 %1286
    %v1292 = vadd.f32 %v1260, %v1281
    %v1293 = vadd.f32 %v1261, %v1283
    %v1294 = vadd.f32 %v1262, %v1285
    %v1295 = vadd.f32 %v1263, %v1287
    %s1296 = sld [smem:[#allocation5 + $0x27]]
    %v1297 = vstv %s1296
    %v1298 = vmul.f32 %v53, %v1297
    %v1299 = vmul.f32 %v54, %v1297
    %v1300 = vmul.f32 %v55, %v1297
    %v1301 = vmul.f32 %v56, %v1297
    %v1306 = vrot.slane %v1298, 2
    %v1307 = vrot.slane %v1299, 2
    %v1308 = vsel %vm214, %v1306, %v1307
    %v1309 = vrot.slane %v1300, 2
    %v1310 = vrot.slane %v1301, 2
    %v1311 = vsel %vm214, %v1309, %v1310
    %v1316 = vadd.f32 %v1292, %v1308
    %v1317 = vadd.f32 %v1293, %v1307
    %v1318 = vadd.f32 %v1294, %v1311
    %v1319 = vadd.f32 %v1295, %v1310
    %s1320 = sld [smem:[#allocation5 + $0x2d]]
    %v1321 = vstv %s1320
    %v1322 = vmul.f32 %v53, %v1321
    %v1323 = vmul.f32 %v54, %v1321
    %v1324 = vmul.f32 %v55, %v1321
    %v1325 = vmul.f32 %v56, %v1321
    %v1330 = vrot.slane %v1322, 2
    %v1331 = vrot.slane %v1323, 2
    %v1332 = vsel %vm214, %v1330, %v1331
    %v1333 = vrot.slane %v1324, 2
    %v1334 = vrot.slane %v1325, 2
    %v1335 = vsel %vm214, %v1333, %v1334
    %1336 = vrot.lane.b32.xlu0 %v1332, 127
    %v1337 = vpop.permute.xlu0 %1336
    %1338 = vrot.lane.b32.xlu0 %v1331, 127
    %v1339 = vpop.permute.xlu0 %1338
    %1340 = vrot.lane.b32.xlu0 %v1335, 127
    %v1341 = vpop.permute.xlu0 %1340
    %1342 = vrot.lane.b32.xlu0 %v1334, 127
    %v1343 = vpop.permute.xlu0 %1342
    %v1348 = vadd.f32 %v1316, %v1337
    %v1349 = vadd.f32 %v1317, %v1339
    %v1350 = vadd.f32 %v1318, %v1341
    %v1351 = vadd.f32 %v1319, %v1343
    %s1352 = sld [smem:[#allocation5 + $0x33]]
    %v1353 = vstv %s1352
    %v1354 = vmul.f32 %v53, %v1353
    %v1355 = vmul.f32 %v54, %v1353
    %v1356 = vmul.f32 %v55, %v1353
    %v1357 = vmul.f32 %v56, %v1353
    %v1362 = vrot.slane %v1354, 2
    %v1363 = vrot.slane %v1355, 2
    %v1364 = vsel %vm214, %v1362, %v1363
    %v1365 = vrot.slane %v1356, 2
    %v1366 = vrot.slane %v1357, 2
    %v1367 = vsel %vm214, %v1365, %v1366
    %1368 = vrot.lane.b32.xlu0 %v1364, 126
    %v1369 = vpop.permute.xlu0 %1368
    %1370 = vrot.lane.b32.xlu0 %v1363, 126
    %v1371 = vpop.permute.xlu0 %1370
    %1372 = vrot.lane.b32.xlu0 %v1367, 126
    %v1373 = vpop.permute.xlu0 %1372
    %1374 = vrot.lane.b32.xlu0 %v1366, 126
    %v1375 = vpop.permute.xlu0 %1374
    %v1380 = vadd.f32 %v1348, %v1369
    %v1381 = vadd.f32 %v1349, %v1371
    %v1382 = vadd.f32 %v1350, %v1373
    %v1383 = vadd.f32 %v1351, %v1375
    %s1384 = sld [smem:[#allocation6 + $0x3]]
    %v1385 = vstv %s1384
    %v1386 = vadd.f32 %v1380, %v1385
    %v1387 = vadd.f32 %v1381, %v1385
    %v1388 = vadd.f32 %v1382, %v1385
    %v1389 = vadd.f32 %v1383, %v1385
    %v1390 = vmax.f32 %v1386, 0.0
    %v1391 = vmax.f32 %v1387, 0.0
    %v1392 = vmax.f32 %v1388, 0.0
    %v1393 = vmax.f32 %v1389, 0.0
    %v1396 = vrot.slane %v1390, 1
    %v1397 = vrot.slane %v1392, 1
    %v1400 = vmax.f32 %v1390, %v1396
    %v1401 = vmax.f32 %v1392, %v1397
    %v1404 = vrot.slane %v1391, 1
    %v1405 = vrot.slane %v1393, 1
    %v1408 = vmax.f32 %v1391, %v1404
    %v1409 = vmax.f32 %v1393, %v1405
    %v1412 = vrot.slane %v1400, 1
    %v1413 = vrot.slane %v1401, 1
    %v1416 = vrot.slane %v1400, 2
    %v1417 = vrot.slane %v1401, 2
    %v1420 = vrot.slane %v1400, 3
    %v1421 = vrot.slane %v1401, 3
    %v1426 = vrot.slane %v1408, 4
    %v1427 = vrot.slane %v1409, 4
    %v1430 = vrot.slane %v1408, 5
    %v1431 = vrot.slane %v1409, 5
    %v1434 = vrot.slane %v1408, 6
    %v1435 = vrot.slane %v1409, 6
    %v1438 = vsel %vm347, %v1400, %v1412
    %v1439 = vsel %vm347, %v1401, %v1413
    %v1440 = vsel %vm350, %v1438, %v1416
    %v1441 = vsel %vm350, %v1439, %v1417
    %v1442 = vsel %vm353, %v1440, %v1420
    %v1443 = vsel %vm353, %v1441, %v1421
    %v1444 = vsel %vm356, %v1442, %v1426
    %v1445 = vsel %vm356, %v1443, %v1427
    %v1446 = vsel %vm359, %v1444, %v1430
    %v1447 = vsel %vm359, %v1445, %v1431
    %v1448 = vsel %vm214, %v1446, %v1434
    %v1449 = vsel %vm214, %v1447, %v1435
    %1452 = vrot.lane.b32.xlu0 %v1448, 127
    %v1453 = vpop.permute.xlu0 %1452
    %1454 = vrot.lane.b32.xlu0 %v1449, 127
    %v1455 = vpop.permute.xlu0 %1454
    %v1458 = vmax.f32 %v1448, %v1453
    %v1459 = vmax.f32 %v1449, %v1455
    %1462 = vrot.lane.b32.xlu0 %v1458, 127
    %v1463 = vpop.permute.xlu0 %1462
    %1464 = vrot.lane.b32.xlu0 %v1459, 127
    %v1465 = vpop.permute.xlu0 %1464
    %1468 = vrot.lane.b32.xlu0 %v1458, 126
    %v1469 = vpop.permute.xlu0 %1468
    %1470 = vrot.lane.b32.xlu0 %v1459, 126
    %v1471 = vpop.permute.xlu0 %1470
    %1474 = vrot.lane.b32.xlu0 %v1458, 125
    %v1475 = vpop.permute.xlu0 %1474
    %1476 = vrot.lane.b32.xlu0 %v1459, 125
    %v1477 = vpop.permute.xlu0 %1476
    %1480 = vrot.lane.b32.xlu0 %v1458, 124
    %v1481 = vpop.permute.xlu0 %1480
    %1482 = vrot.lane.b32.xlu0 %v1459, 124
    %v1483 = vpop.permute.xlu0 %1482
    %1486 = vrot.lane.b32.xlu0 %v1458, 123
    %v1487 = vpop.permute.xlu0 %1486
    %1488 = vrot.lane.b32.xlu0 %v1459, 123
    %v1489 = vpop.permute.xlu0 %1488
    %1492 = vrot.lane.b32.xlu0 %v1458, 122
    %v1493 = vpop.permute.xlu0 %1492
    %1494 = vrot.lane.b32.xlu0 %v1459, 122
    %v1495 = vpop.permute.xlu0 %1494
    %v1498 = vsel %vm412, %v1458, %v1463
    %v1499 = vsel %vm412, %v1459, %v1465
    %v1500 = vsel %vm415, %v1498, %v1469
    %v1501 = vsel %vm415, %v1499, %v1471
    %v1502 = vsel %vm418, %v1500, %v1475
    %v1503 = vsel %vm418, %v1501, %v1477
    %v1504 = vsel %vm421, %v1502, %v1481
    %v1505 = vsel %vm421, %v1503, %v1483
    %v1506 = vsel %vm424, %v1504, %v1487
    %v1507 = vsel %vm424, %v1505, %v1489
    %v1508 = vsel %vm427, %v1506, %v1493
    %v1509 = vsel %vm427, %v1507, %v1495
    %s1510 = sld [smem:[#allocation5 + $0x4]]
    %v1511 = vstv %s1510
    %v1512 = vmul.f32 %v53, %v1511
    %v1513 = vmul.f32 %v54, %v1511
    %v1514 = vmul.f32 %v55, %v1511
    %v1515 = vmul.f32 %v56, %v1511
    %s1516 = sld [smem:[#allocation5 + $0xa]]
    %v1517 = vstv %s1516
    %v1518 = vmul.f32 %v53, %v1517
    %v1519 = vmul.f32 %v54, %v1517
    %v1520 = vmul.f32 %v55, %v1517
    %v1521 = vmul.f32 %v56, %v1517
    %1526 = vrot.lane.b32.xlu0 %v1518, 127
    %v1527 = vpop.permute.xlu0 %1526
    %1528 = vrot.lane.b32.xlu0 %v1519, 127
    %v1529 = vpop.permute.xlu0 %1528
    %1530 = vrot.lane.b32.xlu0 %v1520, 127
    %v1531 = vpop.permute.xlu0 %1530
    %1532 = vrot.lane.b32.xlu0 %v1521, 127
    %v1533 = vpop.permute.xlu0 %1532
    %v1538 = vadd.f32 %v1512, %v1527
    %v1539 = vadd.f32 %v1513, %v1529
    %v1540 = vadd.f32 %v1514, %v1531
    %v1541 = vadd.f32 %v1515, %v1533
    %s1542 = sld [smem:[#allocation5 + $0x10]]
    %v1543 = vstv %s1542
    %v1544 = vmul.f32 %v53, %v1543
    %v1545 = vmul.f32 %v54, %v1543
    %v1546 = vmul.f32 %v55, %v1543
    %v1547 = vmul.f32 %v56, %v1543
    %1552 = vrot.lane.b32.xlu0 %v1544, 126
    %v1553 = vpop.permute.xlu0 %1552
    %1554 = vrot.lane.b32.xlu0 %v1545, 126
    %v1555 = vpop.permute.xlu0 %1554
    %1556 = vrot.lane.b32.xlu0 %v1546, 126
    %v1557 = vpop.permute.xlu0 %1556
    %1558 = vrot.lane.b32.xlu0 %v1547, 126
    %v1559 = vpop.permute.xlu0 %1558
    %v1564 = vadd.f32 %v1538, %v1553
    %v1565 = vadd.f32 %v1539, %v1555
    %v1566 = vadd.f32 %v1540, %v1557
    %v1567 = vadd.f32 %v1541, %v1559
    %s1568 = sld [smem:[#allocation5 + $0x16]]
    %v1569 = vstv %s1568
    %v1570 = vmul.f32 %v53, %v1569
    %v1571 = vmul.f32 %v54, %v1569
    %v1572 = vmul.f32 %v55, %v1569
    %v1573 = vmul.f32 %v56, %v1569
    %v1578 = vrot.slane %v1570, 1
    %v1579 = vrot.slane %v1571, 1
    %v1580 = vsel %vm125, %v1578, %v1579
    %v1581 = vrot.slane %v1572, 1
    %v1582 = vrot.slane %v1573, 1
    %v1583 = vsel %vm125, %v1581, %v1582
    %v1588 = vadd.f32 %v1564, %v1580
    %v1589 = vadd.f32 %v1565, %v1579
    %v1590 = vadd.f32 %v1566, %v1583
    %v1591 = vadd.f32 %v1567, %v1582
    %s1592 = sld [smem:[#allocation5 + $0x1c]]
    %v1593 = vstv %s1592
    %v1594 = vmul.f32 %v53, %v1593
    %v1595 = vmul.f32 %v54, %v1593
    %v1596 = vmul.f32 %v55, %v1593
    %v1597 = vmul.f32 %v56, %v1593
    %v1602 = vrot.slane %v1594, 1
    %v1603 = vrot.slane %v1595, 1
    %v1604 = vsel %vm125, %v1602, %v1603
    %v1605 = vrot.slane %v1596, 1
    %v1606 = vrot.slane %v1597, 1
    %v1607 = vsel %vm125, %v1605, %v1606
    %1608 = vrot.lane.b32.xlu0 %v1604, 127
    %v1609 = vpop.permute.xlu0 %1608
    %1610 = vrot.lane.b32.xlu0 %v1603, 127
    %v1611 = vpop.permute.xlu0 %1610
    %1612 = vrot.lane.b32.xlu0 %v1607, 127
    %v1613 = vpop.permute.xlu0 %1612
    %1614 = vrot.lane.b32.xlu0 %v1606, 127
    %v1615 = vpop.permute.xlu0 %1614
    %v1620 = vadd.f32 %v1588, %v1609
    %v1621 = vadd.f32 %v1589, %v1611
    %v1622 = vadd.f32 %v1590, %v1613
    %v1623 = vadd.f32 %v1591, %v1615
    %s1624 = sld [smem:[#allocation5 + $0x22]]
    %v1625 = vstv %s1624
    %v1626 = vmul.f32 %v53, %v1625
    %v1627 = vmul.f32 %v54, %v1625
    %v1628 = vmul.f32 %v55, %v1625
    %v1629 = vmul.f32 %v56, %v1625
    %v1634 = vrot.slane %v1626, 1
    %v1635 = vrot.slane %v1627, 1
    %v1636 = vsel %vm125, %v1634, %v1635
    %v1637 = vrot.slane %v1628, 1
    %v1638 = vrot.slane %v1629, 1
    %v1639 = vsel %vm125, %v1637, %v1638
    %1640 = vrot.lane.b32.xlu0 %v1636, 126
    %v1641 = vpop.permute.xlu0 %1640
    %1642 = vrot.lane.b32.xlu0 %v1635, 126
    %v1643 = vpop.permute.xlu0 %1642
    %1644 = vrot.lane.b32.xlu0 %v1639, 126
    %v1645 = vpop.permute.xlu0 %1644
    %1646 = vrot.lane.b32.xlu0 %v1638, 126
    %v1647 = vpop.permute.xlu0 %1646
    %v1652 = vadd.f32 %v1620, %v1641
    %v1653 = vadd.f32 %v1621, %v1643
    %v1654 = vadd.f32 %v1622, %v1645
    %v1655 = vadd.f32 %v1623, %v1647
    %s1656 = sld [smem:[#allocation5 + $0x28]]
    %v1657 = vstv %s1656
    %v1658 = vmul.f32 %v53, %v1657
    %v1659 = vmul.f32 %v54, %v1657
    %v1660 = vmul.f32 %v55, %v1657
    %v1661 = vmul.f32 %v56, %v1657
    %v1666 = vrot.slane %v1658, 2
    %v1667 = vrot.slane %v1659, 2
    %v1668 = vsel %vm214, %v1666, %v1667
    %v1669 = vrot.slane %v1660, 2
    %v1670 = vrot.slane %v1661, 2
    %v1671 = vsel %vm214, %v1669, %v1670
    %v1676 = vadd.f32 %v1652, %v1668
    %v1677 = vadd.f32 %v1653, %v1667
    %v1678 = vadd.f32 %v1654, %v1671
    %v1679 = vadd.f32 %v1655, %v1670
    %s1680 = sld [smem:[#allocation5 + $0x2e]]
    %v1681 = vstv %s1680
    %v1682 = vmul.f32 %v53, %v1681
    %v1683 = vmul.f32 %v54, %v1681
    %v1684 = vmul.f32 %v55, %v1681
    %v1685 = vmul.f32 %v56, %v1681
    %v1690 = vrot.slane %v1682, 2
    %v1691 = vrot.slane %v1683, 2
    %v1692 = vsel %vm214, %v1690, %v1691
    %v1693 = vrot.slane %v1684, 2
    %v1694 = vrot.slane %v1685, 2
    %v1695 = vsel %vm214, %v1693, %v1694
    %1696 = vrot.lane.b32.xlu0 %v1692, 127
    %v1697 = vpop.permute.xlu0 %1696
    %1698 = vrot.lane.b32.xlu0 %v1691, 127
    %v1699 = vpop.permute.xlu0 %1698
    %1700 = vrot.lane.b32.xlu0 %v1695, 127
    %v1701 = vpop.permute.xlu0 %1700
    %1702 = vrot.lane.b32.xlu0 %v1694, 127
    %v1703 = vpop.permute.xlu0 %1702
    %v1708 = vadd.f32 %v1676, %v1697
    %v1709 = vadd.f32 %v1677, %v1699
    %v1710 = vadd.f32 %v1678, %v1701
    %v1711 = vadd.f32 %v1679, %v1703
    %s1712 = sld [smem:[#allocation5 + $0x34]]
    %v1713 = vstv %s1712
    %v1714 = vmul.f32 %v53, %v1713
    %v1715 = vmul.f32 %v54, %v1713
    %v1716 = vmul.f32 %v55, %v1713
    %v1717 = vmul.f32 %v56, %v1713
    %v1722 = vrot.slane %v1714, 2
    %v1723 = vrot.slane %v1715, 2
    %v1724 = vsel %vm214, %v1722, %v1723
    %v1725 = vrot.slane %v1716, 2
    %v1726 = vrot.slane %v1717, 2
    %v1727 = vsel %vm214, %v1725, %v1726
    %1728 = vrot.lane.b32.xlu0 %v1724, 126
    %v1729 = vpop.permute.xlu0 %1728
    %1730 = vrot.lane.b32.xlu0 %v1723, 126
    %v1731 = vpop.permute.xlu0 %1730
    %1732 = vrot.lane.b32.xlu0 %v1727, 126
    %v1733 = vpop.permute.xlu0 %1732
    %1734 = vrot.lane.b32.xlu0 %v1726, 126
    %v1735 = vpop.permute.xlu0 %1734
    %v1740 = vadd.f32 %v1708, %v1729
    %v1741 = vadd.f32 %v1709, %v1731
    %v1742 = vadd.f32 %v1710, %v1733
    %v1743 = vadd.f32 %v1711, %v1735
    %s1744 = sld [smem:[#allocation6 + $0x4]]
    %v1745 = vstv %s1744
    %v1746 = vadd.f32 %v1740, %v1745
    %v1747 = vadd.f32 %v1741, %v1745
    %v1748 = vadd.f32 %v1742, %v1745
    %v1749 = vadd.f32 %v1743, %v1745
    %v1750 = vmax.f32 %v1746, 0.0
    %v1751 = vmax.f32 %v1747, 0.0
    %v1752 = vmax.f32 %v1748, 0.0
    %v1753 = vmax.f32 %v1749, 0.0
    %v1756 = vrot.slane %v1750, 1
    %v1757 = vrot.slane %v1752, 1
    %v1760 = vmax.f32 %v1750, %v1756
    %v1761 = vmax.f32 %v1752, %v1757
    %v1764 = vrot.slane %v1751, 1
    %v1765 = vrot.slane %v1753, 1
    %v1768 = vmax.f32 %v1751, %v1764
    %v1769 = vmax.f32 %v1753, %v1765
    %v1772 = vrot.slane %v1760, 1
    %v1773 = vrot.slane %v1761, 1
    %v1776 = vrot.slane %v1760, 2
    %v1777 = vrot.slane %v1761, 2
    %v1780 = vrot.slane %v1760, 3
    %v1781 = vrot.slane %v1761, 3
    %v1786 = vrot.slane %v1768, 4
    %v1787 = vrot.slane %v1769, 4
    %v1790 = vrot.slane %v1768, 5
    %v1791 = vrot.slane %v1769, 5
    %v1794 = vrot.slane %v1768, 6
    %v1795 = vrot.slane %v1769, 6
    %v1798 = vsel %vm347, %v1760, %v1772
    %v1799 = vsel %vm347, %v1761, %v1773
    %v1800 = vsel %vm350, %v1798, %v1776
    %v1801 = vsel %vm350, %v1799, %v1777
    %v1802 = vsel %vm353, %v1800, %v1780
    %v1803 = vsel %vm353, %v1801, %v1781
    %v1804 = vsel %vm356, %v1802, %v1786
    %v1805 = vsel %vm356, %v1803, %v1787
    %v1806 = vsel %vm359, %v1804, %v1790
    %v1807 = vsel %vm359, %v1805, %v1791
    %v1808 = vsel %vm214, %v1806, %v1794
    %v1809 = vsel %vm214, %v1807, %v1795
    %1812 = vrot.lane.b32.xlu0 %v1808, 127
    %v1813 = vpop.permute.xlu0 %1812
    %1814 = vrot.lane.b32.xlu0 %v1809, 127
    %v1815 = vpop.permute.xlu0 %1814
    %v1818 = vmax.f32 %v1808, %v1813
    %v1819 = vmax.f32 %v1809, %v1815
    %1822 = vrot.lane.b32.xlu0 %v1818, 127
    %v1823 = vpop.permute.xlu0 %1822
    %1824 = vrot.lane.b32.xlu0 %v1819, 127
    %v1825 = vpop.permute.xlu0 %1824
    %1828 = vrot.lane.b32.xlu0 %v1818, 126
    %v1829 = vpop.permute.xlu0 %1828
    %1830 = vrot.lane.b32.xlu0 %v1819, 126
    %v1831 = vpop.permute.xlu0 %1830
    %1834 = vrot.lane.b32.xlu0 %v1818, 125
    %v1835 = vpop.permute.xlu0 %1834
    %1836 = vrot.lane.b32.xlu0 %v1819, 125
    %v1837 = vpop.permute.xlu0 %1836
    %1840 = vrot.lane.b32.xlu0 %v1818, 124
    %v1841 = vpop.permute.xlu0 %1840
    %1842 = vrot.lane.b32.xlu0 %v1819, 124
    %v1843 = vpop.permute.xlu0 %1842
    %1846 = vrot.lane.b32.xlu0 %v1818, 123
    %v1847 = vpop.permute.xlu0 %1846
    %1848 = vrot.lane.b32.xlu0 %v1819, 123
    %v1849 = vpop.permute.xlu0 %1848
    %1852 = vrot.lane.b32.xlu0 %v1818, 122
    %v1853 = vpop.permute.xlu0 %1852
    %1854 = vrot.lane.b32.xlu0 %v1819, 122
    %v1855 = vpop.permute.xlu0 %1854
    %v1858 = vsel %vm412, %v1818, %v1823
    %v1859 = vsel %vm412, %v1819, %v1825
    %v1860 = vsel %vm415, %v1858, %v1829
    %v1861 = vsel %vm415, %v1859, %v1831
    %v1862 = vsel %vm418, %v1860, %v1835
    %v1863 = vsel %vm418, %v1861, %v1837
    %v1864 = vsel %vm421, %v1862, %v1841
    %v1865 = vsel %vm421, %v1863, %v1843
    %v1866 = vsel %vm424, %v1864, %v1847
    %v1867 = vsel %vm424, %v1865, %v1849
    %v1868 = vsel %vm427, %v1866, %v1853
    %v1869 = vsel %vm427, %v1867, %v1855
    %s1870 = sld [smem:[#allocation5 + $0x5]]
    %v1871 = vstv %s1870
    %v1872 = vmul.f32 %v53, %v1871
    %v1873 = vmul.f32 %v54, %v1871
    %v1874 = vmul.f32 %v55, %v1871
    %v1875 = vmul.f32 %v56, %v1871
    %s1876 = sld [smem:[#allocation5 + $0xb]]
    %v1877 = vstv %s1876
    %v1878 = vmul.f32 %v53, %v1877
    %v1879 = vmul.f32 %v54, %v1877
    %v1880 = vmul.f32 %v55, %v1877
    %v1881 = vmul.f32 %v56, %v1877
    %1886 = vrot.lane.b32.xlu0 %v1878, 127
    %v1887 = vpop.permute.xlu0 %1886
    %1888 = vrot.lane.b32.xlu0 %v1879, 127
    %v1889 = vpop.permute.xlu0 %1888
    %1890 = vrot.lane.b32.xlu0 %v1880, 127
    %v1891 = vpop.permute.xlu0 %1890
    %1892 = vrot.lane.b32.xlu0 %v1881, 127
    %v1893 = vpop.permute.xlu0 %1892
    %v1898 = vadd.f32 %v1872, %v1887
    %v1899 = vadd.f32 %v1873, %v1889
    %v1900 = vadd.f32 %v1874, %v1891
    %v1901 = vadd.f32 %v1875, %v1893
    %s1902 = sld [smem:[#allocation5 + $0x11]]
    %v1903 = vstv %s1902
    %v1904 = vmul.f32 %v53, %v1903
    %v1905 = vmul.f32 %v54, %v1903
    %v1906 = vmul.f32 %v55, %v1903
    %v1907 = vmul.f32 %v56, %v1903
    %1912 = vrot.lane.b32.xlu0 %v1904, 126
    %v1913 = vpop.permute.xlu0 %1912
    %1914 = vrot.lane.b32.xlu0 %v1905, 126
    %v1915 = vpop.permute.xlu0 %1914
    %1916 = vrot.lane.b32.xlu0 %v1906, 126
    %v1917 = vpop.permute.xlu0 %1916
    %1918 = vrot.lane.b32.xlu0 %v1907, 126
    %v1919 = vpop.permute.xlu0 %1918
    %v1924 = vadd.f32 %v1898, %v1913
    %v1925 = vadd.f32 %v1899, %v1915
    %v1926 = vadd.f32 %v1900, %v1917
    %v1927 = vadd.f32 %v1901, %v1919
    %s1928 = sld [smem:[#allocation5 + $0x17]]
    %v1929 = vstv %s1928
    %v1930 = vmul.f32 %v53, %v1929
    %v1931 = vmul.f32 %v54, %v1929
    %v1932 = vmul.f32 %v55, %v1929
    %v1933 = vmul.f32 %v56, %v1929
    %v1938 = vrot.slane %v1930, 1
    %v1939 = vrot.slane %v1931, 1
    %v1940 = vsel %vm125, %v1938, %v1939
    %v1941 = vrot.slane %v1932, 1
    %v1942 = vrot.slane %v1933, 1
    %v1943 = vsel %vm125, %v1941, %v1942
    %v1948 = vadd.f32 %v1924, %v1940
    %v1949 = vadd.f32 %v1925, %v1939
    %v1950 = vadd.f32 %v1926, %v1943
    %v1951 = vadd.f32 %v1927, %v1942
    %s1952 = sld [smem:[#allocation5 + $0x1d]]
    %v1953 = vstv %s1952
    %v1954 = vmul.f32 %v53, %v1953
    %v1955 = vmul.f32 %v54, %v1953
    %v1956 = vmul.f32 %v55, %v1953
    %v1957 = vmul.f32 %v56, %v1953
    %v1962 = vrot.slane %v1954, 1
    %v1963 = vrot.slane %v1955, 1
    %v1964 = vsel %vm125, %v1962, %v1963
    %v1965 = vrot.slane %v1956, 1
    %v1966 = vrot.slane %v1957, 1
    %v1967 = vsel %vm125, %v1965, %v1966
    %1968 = vrot.lane.b32.xlu0 %v1964, 127
    %v1969 = vpop.permute.xlu0 %1968
    %1970 = vrot.lane.b32.xlu0 %v1963, 127
    %v1971 = vpop.permute.xlu0 %1970
    %1972 = vrot.lane.b32.xlu0 %v1967, 127
    %v1973 = vpop.permute.xlu0 %1972
    %1974 = vrot.lane.b32.xlu0 %v1966, 127
    %v1975 = vpop.permute.xlu0 %1974
    %v1980 = vadd.f32 %v1948, %v1969
    %v1981 = vadd.f32 %v1949, %v1971
    %v1982 = vadd.f32 %v1950, %v1973
    %v1983 = vadd.f32 %v1951, %v1975
    %s1984 = sld [smem:[#allocation5 + $0x23]]
    %v1985 = vstv %s1984
    %v1986 = vmul.f32 %v53, %v1985
    %v1987 = vmul.f32 %v54, %v1985
    %v1988 = vmul.f32 %v55, %v1985
    %v1989 = vmul.f32 %v56, %v1985
    %v1994 = vrot.slane %v1986, 1
    %v1995 = vrot.slane %v1987, 1
    %v1996 = vsel %vm125, %v1994, %v1995
    %v1997 = vrot.slane %v1988, 1
    %v1998 = vrot.slane %v1989, 1
    %v1999 = vsel %vm125, %v1997, %v1998
    %2000 = vrot.lane.b32.xlu0 %v1996, 126
    %v2001 = vpop.permute.xlu0 %2000
    %2002 = vrot.lane.b32.xlu0 %v1995, 126
    %v2003 = vpop.permute.xlu0 %2002
    %2004 = vrot.lane.b32.xlu0 %v1999, 126
    %v2005 = vpop.permute.xlu0 %2004
    %2006 = vrot.lane.b32.xlu0 %v1998, 126
    %v2007 = vpop.permute.xlu0 %2006
    %v2012 = vadd.f32 %v1980, %v2001
    %v2013 = vadd.f32 %v1981, %v2003
    %v2014 = vadd.f32 %v1982, %v2005
    %v2015 = vadd.f32 %v1983, %v2007
    %s2016 = sld [smem:[#allocation5 + $0x29]]
    %v2017 = vstv %s2016
    %v2018 = vmul.f32 %v53, %v2017
    %v2019 = vmul.f32 %v54, %v2017
    %v2020 = vmul.f32 %v55, %v2017
    %v2021 = vmul.f32 %v56, %v2017
    %v2026 = vrot.slane %v2018, 2
    %v2027 = vrot.slane %v2019, 2
    %v2028 = vsel %vm214, %v2026, %v2027
    %v2029 = vrot.slane %v2020, 2
    %v2030 = vrot.slane %v2021, 2
    %v2031 = vsel %vm214, %v2029, %v2030
    %v2036 = vadd.f32 %v2012, %v2028
    %v2037 = vadd.f32 %v2013, %v2027
    %v2038 = vadd.f32 %v2014, %v2031
    %v2039 = vadd.f32 %v2015, %v2030
    %s2040 = sld [smem:[#allocation5 + $0x2f]]
    %v2041 = vstv %s2040
    %v2042 = vmul.f32 %v53, %v2041
    %v2043 = vmul.f32 %v54, %v2041
    %v2044 = vmul.f32 %v55, %v2041
    %v2045 = vmul.f32 %v56, %v2041
    %v2050 = vrot.slane %v2042, 2
    %v2051 = vrot.slane %v2043, 2
    %v2052 = vsel %vm214, %v2050, %v2051
    %v2053 = vrot.slane %v2044, 2
    %v2054 = vrot.slane %v2045, 2
    %v2055 = vsel %vm214, %v2053, %v2054
    %2056 = vrot.lane.b32.xlu0 %v2052, 127
    %v2057 = vpop.permute.xlu0 %2056
    %2058 = vrot.lane.b32.xlu0 %v2051, 127
    %v2059 = vpop.permute.xlu0 %2058
    %2060 = vrot.lane.b32.xlu0 %v2055, 127
    %v2061 = vpop.permute.xlu0 %2060
    %2062 = vrot.lane.b32.xlu0 %v2054, 127
    %v2063 = vpop.permute.xlu0 %2062
    %v2068 = vadd.f32 %v2036, %v2057
    %v2069 = vadd.f32 %v2037, %v2059
    %v2070 = vadd.f32 %v2038, %v2061
    %v2071 = vadd.f32 %v2039, %v2063
    %s2072 = sld [smem:[#allocation5 + $0x35]]
    %v2073 = vstv %s2072
    %v2074 = vmul.f32 %v53, %v2073
    %v2075 = vmul.f32 %v54, %v2073
    %v2076 = vmul.f32 %v55, %v2073
    %v2077 = vmul.f32 %v56, %v2073
    %v2082 = vrot.slane %v2074, 2
    %v2083 = vrot.slane %v2075, 2
    %v2084 = vsel %vm214, %v2082, %v2083
    %v2085 = vrot.slane %v2076, 2
    %v2086 = vrot.slane %v2077, 2
    %v2087 = vsel %vm214, %v2085, %v2086
    %2088 = vrot.lane.b32.xlu0 %v2084, 126
    %v2089 = vpop.permute.xlu0 %2088
    %2090 = vrot.lane.b32.xlu0 %v2083, 126
    %v2091 = vpop.permute.xlu0 %2090
    %2092 = vrot.lane.b32.xlu0 %v2087, 126
    %v2093 = vpop.permute.xlu0 %2092
    %2094 = vrot.lane.b32.xlu0 %v2086, 126
    %v2095 = vpop.permute.xlu0 %2094
    %v2100 = vadd.f32 %v2068, %v2089
    %v2101 = vadd.f32 %v2069, %v2091
    %v2102 = vadd.f32 %v2070, %v2093
    %v2103 = vadd.f32 %v2071, %v2095
    %s2104 = sld [smem:[#allocation6 + $0x5]]
    %v2105 = vstv %s2104
    %v2106 = vadd.f32 %v2100, %v2105
    %v2107 = vadd.f32 %v2101, %v2105
    %v2108 = vadd.f32 %v2102, %v2105
    %v2109 = vadd.f32 %v2103, %v2105
    %v2110 = vmax.f32 %v2106, 0.0
    %v2111 = vmax.f32 %v2107, 0.0
    %v2112 = vmax.f32 %v2108, 0.0
    %v2113 = vmax.f32 %v2109, 0.0
    %v2116 = vrot.slane %v2110, 1
    %v2117 = vrot.slane %v2112, 1
    %v2120 = vmax.f32 %v2110, %v2116
    %v2121 = vmax.f32 %v2112, %v2117
    %v2124 = vrot.slane %v2111, 1
    %v2125 = vrot.slane %v2113, 1
    %v2128 = vmax.f32 %v2111, %v2124
    %v2129 = vmax.f32 %v2113, %v2125
    %v2132 = vrot.slane %v2120, 1
    %v2133 = vrot.slane %v2121, 1
    %v2136 = vrot.slane %v2120, 2
    %v2137 = vrot.slane %v2121, 2
    %v2140 = vrot.slane %v2120, 3
    %v2141 = vrot.slane %v2121, 3
    %v2146 = vrot.slane %v2128, 4
    %v2147 = vrot.slane %v2129, 4
    %v2150 = vrot.slane %v2128, 5
    %v2151 = vrot.slane %v2129, 5
    %v2154 = vrot.slane %v2128, 6
    %v2155 = vrot.slane %v2129, 6
    %v2158 = vsel %vm347, %v2120, %v2132
    %v2159 = vsel %vm347, %v2121, %v2133
    %v2160 = vsel %vm350, %v2158, %v2136
    %v2161 = vsel %vm350, %v2159, %v2137
    %v2162 = vsel %vm353, %v2160, %v2140
    %v2163 = vsel %vm353, %v2161, %v2141
    %v2164 = vsel %vm356, %v2162, %v2146
    %v2165 = vsel %vm356, %v2163, %v2147
    %v2166 = vsel %vm359, %v2164, %v2150
    %v2167 = vsel %vm359, %v2165, %v2151
    %v2168 = vsel %vm214, %v2166, %v2154
    %v2169 = vsel %vm214, %v2167, %v2155
    %2172 = vrot.lane.b32.xlu0 %v2168, 127
    %v2173 = vpop.permute.xlu0 %2172
    %2174 = vrot.lane.b32.xlu0 %v2169, 127
    %v2175 = vpop.permute.xlu0 %2174
    %v2178 = vmax.f32 %v2168, %v2173
    %v2179 = vmax.f32 %v2169, %v2175
    %2182 = vrot.lane.b32.xlu0 %v2178, 127
    %v2183 = vpop.permute.xlu0 %2182
    %2184 = vrot.lane.b32.xlu0 %v2179, 127
    %v2185 = vpop.permute.xlu0 %2184
    %2188 = vrot.lane.b32.xlu0 %v2178, 126
    %v2189 = vpop.permute.xlu0 %2188
    %2190 = vrot.lane.b32.xlu0 %v2179, 126
    %v2191 = vpop.permute.xlu0 %2190
    %2194 = vrot.lane.b32.xlu0 %v2178, 125
    %v2195 = vpop.permute.xlu0 %2194
    %2196 = vrot.lane.b32.xlu0 %v2179, 125
    %v2197 = vpop.permute.xlu0 %2196
    %2200 = vrot.lane.b32.xlu0 %v2178, 124
    %v2201 = vpop.permute.xlu0 %2200
    %2202 = vrot.lane.b32.xlu0 %v2179, 124
    %v2203 = vpop.permute.xlu0 %2202
    %2206 = vrot.lane.b32.xlu0 %v2178, 123
    %v2207 = vpop.permute.xlu0 %2206
    %2208 = vrot.lane.b32.xlu0 %v2179, 123
    %v2209 = vpop.permute.xlu0 %2208
    %2212 = vrot.lane.b32.xlu0 %v2178, 122
    %v2213 = vpop.permute.xlu0 %2212
    %2214 = vrot.lane.b32.xlu0 %v2179, 122
    %v2215 = vpop.permute.xlu0 %2214
    %v2218 = vsel %vm412, %v2178, %v2183
    %v2219 = vsel %vm412, %v2179, %v2185
    %v2220 = vsel %vm415, %v2218, %v2189
    %v2221 = vsel %vm415, %v2219, %v2191
    %v2222 = vsel %vm418, %v2220, %v2195
    %v2223 = vsel %vm418, %v2221, %v2197
    %v2224 = vsel %vm421, %v2222, %v2201
    %v2225 = vsel %vm421, %v2223, %v2203
    %v2226 = vsel %vm424, %v2224, %v2207
    %v2227 = vsel %vm424, %v2225, %v2209
    %v2228 = vsel %vm427, %v2226, %v2213
    %v2229 = vsel %vm427, %v2227, %v2215
    %2232 = vrot.lane.b32.xlu0 %v788, 7
    %v2233 = vpop.permute.xlu0 %2232
    %2234 = vrot.lane.b32.xlu0 %v789, 7
    %v2235 = vpop.permute.xlu0 %2234
    %2240 = vrot.lane.b32.xlu0 %v1148, 14
    %v2241 = vpop.permute.xlu0 %2240
    %2242 = vrot.lane.b32.xlu0 %v1149, 14
    %v2243 = vpop.permute.xlu0 %2242
    %2248 = vrot.lane.b32.xlu0 %v1508, 21
    %v2249 = vpop.permute.xlu0 %2248
    %2250 = vrot.lane.b32.xlu0 %v1509, 21
    %v2251 = vpop.permute.xlu0 %2250
    %2256 = vrot.lane.b32.xlu0 %v1868, 28
    %v2257 = vpop.permute.xlu0 %2256
    %2258 = vrot.lane.b32.xlu0 %v1869, 28
    %v2259 = vpop.permute.xlu0 %2258
    %2264 = vrot.lane.b32.xlu0 %v2228, 35
    %v2265 = vpop.permute.xlu0 %2264
    %2266 = vrot.lane.b32.xlu0 %v2229, 35
    %v2267 = vpop.permute.xlu0 %2266
    %vm2270 = vcmask 56320
    %v2271 = vsel %vm2270, %v428, %v2233
    %v2272 = vsel %vm2270, %v429, %v2235
    %vm2273 = vcmask 113664
    %v2274 = vsel %vm2273, %v2271, %v2241
    %v2275 = vsel %vm2273, %v2272, %v2243
    %vm2276 = vcmask 171008
    %v2277 = vsel %vm2276, %v2274, %v2249
    %v2278 = vsel %vm2276, %v2275, %v2251
    %vm2279 = vcmask 228352
    %v2280 = vsel %vm2279, %v2277, %v2257
    %v2281 = vsel %vm2279, %v2278, %v2259
    %vm2282 = vcmask 285696
    %v2283 = vsel %vm2282, %v2280, %v2265
    %v2284 = vsel %vm2282, %v2281, %v2267
    %vm2285 = vcmask 342016
    %2286 = vst.msk [vmem:[%s3] sm:$0x7f] %vm2285, %v2283
    %2287 = vst.msk [vmem:[%s3 + $0x8] sm:$0x7f] %vm2285, %v2284
    // Predicated region
    $region26: #{tpu_custom_call.1} parent=1 // pred_check
      _
    $region27: #{tpu_custom_call.1} parent=1 // pred_check_branch
      %2289 = sbr.rel (0) target = $region29
    $region28: #{tpu_custom_call.1} parent=1 // pred_region
      _
    $region29: #{tpu_custom_call.1} parent=1 // pred_fallthru
      _
    // Predicated region
    $region30: #{tpu_custom_call.1} parent=1 // pred_check
      _
    $region31: #{tpu_custom_call.1} parent=1 // pred_check_branch
      %2291 = sbr.rel (0) target = $region33
    $region32: #{tpu_custom_call.1} parent=1 // pred_region
      _
    $region33: #{tpu_custom_call.1} parent=1 // pred_fallthru
      _
    %2292 = vsyncpa [#allocation3], 1
    %2293 = vsyncpa [#allocation4], 1
    %2294 = vsyncpa [#allocation7], 1

</llo_original>
